<compile_context>
chip_gen: v6e
topology: v6e:2x2x1
jax: 0.10.0
libtpu: 0.0.40
codegen_flags: <defaults>
</compile_context>

<pallas_src>
import math

import jax
import jax.numpy as jnp
from jax.experimental import pallas as pl

# ---------------------------------------------------------------------------
# Model / problem sizes (small, consistent with the module's constructor args)
# ---------------------------------------------------------------------------
BATCH = 2
SEQ = 8
D_MODEL = 32
HEADS = 4
D_FF = 64
DPH = D_MODEL // HEADS          # dim per head
EPS = 1e-6
NEG_INF = -1e18                 # OpenNMT uses masked_fill(mask, -1e18)
N_TOK = BATCH * SEQ             # flattened token count
SLAB_W = 3 * D_MODEL            # shared lane width (96) of the two packed slabs

# weight-slab row offsets (all multiples of the bf16 sublane tile of 16)
_W_QKV_R, _WO_R, _W1_R, _W2_R = 0, 32, 64, 96
# bias/LN-slab row indices
_LN1G, _LN1B, _BQKV, _BO, _LN2G, _LN2B, _B1, _B2 = range(8)


def _layer_norm(x, gamma, beta):
    # x: (N, D).  Biased variance in one pass (var = E[x^2] - mean^2); matches nn.LayerNorm
    # up to rounding at these magnitudes.  f32 throughout (elementwise stays f32 on purpose).
    mean = jnp.mean(x, axis=-1, keepdims=True)
    mean_sq = jnp.mean(x * x, axis=-1, keepdims=True)
    var = mean_sq - mean * mean
    return (x - mean) * jax.lax.rsqrt(var + EPS) * gamma + beta


def encoder_layer_kernel(x_ref, bias_ref, w_ref, b_ref, out_ref):
    # Flatten (B, S, D) -> (B*S, D): pure leading-dim merge, layout-free.
    x = x_ref[...].reshape(N_TOK, D_MODEL)          # (16, 32) f32
    attn_bias = bias_ref[...]                       # (16, 16) f32 additive mask (pad + cross-batch)
    w = w_ref[...]                                  # (160, 96) bf16 packed weights
    b = b_ref[...]                                  # (8, 96)   f32 packed biases / LN params

    # ---- unpack slabs (static slices, lane offset 0 everywhere) --------------
    ln1_g = b[_LN1G:_LN1G + 1, :D_MODEL]
    ln1_b = b[_LN1B:_LN1B + 1, :D_MODEL]
    b_qkv = b[_BQKV:_BQKV + 1, :3 * D_MODEL]
    bo    = b[_BO:_BO + 1, :D_MODEL]
    ln2_g = b[_LN2G:_LN2G + 1, :D_MODEL]
    ln2_b = b[_LN2B:_LN2B + 1, :D_MODEL]
    b1    = b[_B1:_B1 + 1, :D_FF]
    b2    = b[_B2:_B2 + 1, :D_MODEL]

    w_qkv = w[_W_QKV_R:_W_QKV_R + D_MODEL, :3 * D_MODEL]   # (32, 96) bf16, 1/sqrt(dph) folded into Q cols
    wo    = w[_WO_R:_WO_R + D_MODEL, :D_MODEL]             # (32, 32) bf16
    w1    = w[_W1_R:_W1_R + D_MODEL, :D_FF]                # (32, 64) bf16
    w2    = w[_W2_R:_W2_R + D_FF, :D_MODEL]                # (64, 32) bf16

    # ---- pre-attention LayerNorm + fused Q/K/V projection ---------------------
    h = _layer_norm(x, ln1_g, ln1_b)
    qkv = jnp.dot(h.astype(jnp.bfloat16), w_qkv,
                  preferred_element_type=jnp.float32) + b_qkv          # (16, 96) f32
    q = qkv[:, :D_MODEL].astype(jnp.bfloat16)                          # (16, 32)
    k = qkv[:, D_MODEL:2 * D_MODEL]                                    # (16, 32) f32
    v = qkv[:, 2 * D_MODEL:].astype(jnp.bfloat16)                      # (16, 32)
    kt = k.T                                                           # (32, 16): ONE transpose for all heads

    # ---- per-head attention, all B*S tokens in one score matmul ---------------
    # Cross-batch pairs and padded keys are killed by the precomputed additive bias, so a
    # single (N, N) matmul per head replaces B small (S, S) matmuls; mask handling and the
    # 1/sqrt(dph) scale are fully hoisted out of this loop.
    attn = None
    for hd in range(HEADS):
        sl = slice(hd * DPH, (hd + 1) * DPH)
        scores = jnp.dot(q[:, sl], kt[sl, :].astype(jnp.bfloat16),
                         preferred_element_type=jnp.float32) + attn_bias       # (16, 16) f32
        scores = scores - jnp.max(scores, axis=-1, keepdims=True)
        p = jnp.exp(scores)
        # EUP reciprocal, applied AFTER the PV matmul (per-row scale commutes through it).
        inv = pl.reciprocal(jnp.sum(p, axis=-1, keepdims=True), approx=True)   # (16, 1)
        ctx = jnp.dot(p.astype(jnp.bfloat16), v[:, sl],
                      preferred_element_type=jnp.float32) * inv                # (16, 8)
        # Fused head-concat + output projection: concat(ctx) @ Wo == sum_h ctx_h @ Wo[h*dph:(h+1)*dph].
        part = jnp.dot(ctx.astype(jnp.bfloat16), wo[sl, :],
                       preferred_element_type=jnp.float32)                     # (16, 32)
        attn = part if attn is None else attn + part
    # TODO(synk): attention/residual dropout omitted (identity in eval mode).
    out1 = attn + bo + x                                                       # residual

    # ---- PositionwiseFeedForward ----------------------------------------------
    h2 = _layer_norm(out1, ln2_g, ln2_b)
    inter = jnp.maximum(
        jnp.dot(h2.astype(jnp.bfloat16), w1, preferred_element_type=jnp.float32) + b1, 0.0)
    ffn = jnp.dot(inter.astype(jnp.bfloat16), w2, preferred_element_type=jnp.float32) + b2
    out_ref[...] = (ffn + out1).reshape(out_ref.shape)


# ---------------------------------------------------------------------------
# One-time host-side packing (hoisted OUT of the per-call path)
# ---------------------------------------------------------------------------
def prepare_operands(params, mask):
    """Fold scales, pack all weights/biases into two slabs, build the additive mask.

    Call once per (weights, mask); only the packed arrays go through the jitted forward.
    """
    inv_sqrt = 1.0 / math.sqrt(DPH)
    w_qkv = jnp.concatenate(
        [params["wq"] * inv_sqrt, params["wk"], params["wv"]], axis=1)        # (32, 96)
    b_qkv = jnp.concatenate(
        [params["bq"] * inv_sqrt, params["bk"], params["bv"]], axis=1)        # (1, 96)

    def pad_lanes(a, n=SLAB_W):
        return jnp.pad(a, ((0, 0), (0, n - a.shape[1])))

    # bf16 weight slab: rows [0:32]=W_qkv, [32:64]=Wo, [64:96]=W1, [96:160]=W2, 96 lanes wide.
    w_slab = jnp.concatenate(
        [pad_lanes(w_qkv), pad_lanes(params["wo"]),
         pad_lanes(params["w1"]), pad_lanes(params["w2"])], axis=0).astype(jnp.bfloat16)

    # f32 bias/LN slab, one row per vector, 96 lanes wide, all slices start at lane 0.
    b_slab = jnp.concatenate(
        [pad_lanes(params["ln1_g"]), pad_lanes(params["ln1_b"]), pad_lanes(b_qkv),
         pad_lanes(params["bo"]), pad_lanes(params["ln2_g"]), pad_lanes(params["ln2_b"]),
         pad_lanes(params["b1"]), pad_lanes(params["b2"])], axis=0).astype(jnp.float32)

    # Additive attention bias over the flattened token axis:
    # -1e18 where the key is padded OR query/key belong to different batch elements.
    batch_id = jnp.arange(N_TOK, dtype=jnp.int32) // SEQ
    key_pad = mask.reshape(N_TOK) != 0
    blocked = (batch_id[:, None] != batch_id[None, :]) | key_pad[None, :]
    attn_bias = jnp.where(blocked, NEG_INF, 0.0).astype(jnp.float32)          # (N, N)
    return w_slab, b_slab, attn_bias


@jax.jit
def transformer_encoder_layer(x, attn_bias, w_slab, b_slab):
    """x: (B, S, D) f32.  All operands fit whole in VMEM; grid=() -> single invocation."""
    return pl.pallas_call(
        encoder_layer_kernel,
        out_shape=jax.ShapeDtypeStruct(x.shape, jnp.float32),
    )(x, attn_bias, w_slab, b_slab)


# ---------------------------------------------------------------------------
# Pure-JAX reference (mirrors the PyTorch module) for a correctness check.
# ---------------------------------------------------------------------------
def reference_forward(x, mask, params):
    def ln(t, g, b):
        mu = jnp.mean(t, axis=-1, keepdims=True)
        var = jnp.mean((t - mu) ** 2, axis=-1, keepdims=True)
        return (t - mu) / jnp.sqrt(var + EPS) * g + b

    B, S, D = x.shape
    h = ln(x, params["ln1_g"], params["ln1_b"])
    q = h @ params["wq"] + params["bq"]
    k = h @ params["wk"] + params["bk"]
    v = h @ params["wv"] + params["bv"]

    def split(t):
        return t.reshape(B, S, HEADS, DPH).transpose(0, 2, 1, 3)

    qh, kh, vh = split(q) / math.sqrt(DPH), split(k), split(v)
    scores = jnp.einsum("bhqd,bhkd->bhqk", qh, kh)
    scores = jnp.where(mask[:, None, :, :] != 0, NEG_INF, scores)
    p = jax.nn.softmax(scores, axis=-1)
    ctx = jnp.einsum("bhqk,bhkd->bhqd", p, vh).transpose(0, 2, 1, 3).reshape(B, S, D)
    attn = ctx @ params["wo"] + params["bo"]
    out = attn + x
    h2 = ln(out, params["ln2_g"], params["ln2_b"])
    ffn = jnp.maximum(h2 @ params["w1"] + params["b1"], 0.0) @ params["w2"] + params["b2"]
    return ffn + out


def init_params(key):
    ks = jax.random.split(key, 12)
    scale = 0.05

    def nrm(k, shape):
        return jax.random.normal(k, shape, jnp.float32) * scale

    return {
        # LayerNorm params: torch default init (ones / zeros)
        "ln1_g": jnp.ones((1, D_MODEL), jnp.float32),
        "ln1_b": jnp.zeros((1, D_MODEL), jnp.float32),
        "ln2_g": jnp.ones((1, D_MODEL), jnp.float32),
        "ln2_b": jnp.zeros((1, D_MODEL), jnp.float32),
        # attention projections (stored (in, out))
        "wq": nrm(ks[0], (D_MODEL, D_MODEL)), "bq": nrm(ks[1], (1, D_MODEL)),
        "wk": nrm(ks[2], (D_MODEL, D_MODEL)), "bk": nrm(ks[3], (1, D_MODEL)),
        "wv": nrm(ks[4], (D_MODEL, D_MODEL)), "bv": nrm(ks[5], (1, D_MODEL)),
        "wo": nrm(ks[6], (D_MODEL, D_MODEL)), "bo": nrm(ks[7], (1, D_MODEL)),
        # feed-forward
        "w1": nrm(ks[8], (D_MODEL, D_FF)), "b1": nrm(ks[9], (1, D_FF)),
        "w2": nrm(ks[10], (D_FF, D_MODEL)), "b2": nrm(ks[11], (1, D_MODEL)),
    }


if __name__ == "__main__":
    key = jax.random.PRNGKey(0)
    k_x, k_p = jax.random.split(key)

    x = jax.random.normal(k_x, (BATCH, SEQ, D_MODEL), jnp.float32)
    # mask: 1 = padding position (masked), matching OpenNMT's ~sequence_mask convention.
    lengths = jnp.array([6, 5], jnp.int32)                          # valid lengths per batch
    pos = jnp.arange(SEQ, dtype=jnp.int32)[None, :]                 # (1, S)
    mask = (pos >= lengths[:, None]).astype(jnp.int32)[:, None, :]  # (B, 1, S)

    params = init_params(k_p)

    # One-time host prep (weights + mask only); not on the per-call path.
    w_slab, b_slab, attn_bias = prepare_operands(params, mask)

    out = transformer_encoder_layer(x, attn_bias, w_slab, b_slab)
    jax.block_until_ready(out)

    assert out.shape == (BATCH, SEQ, D_MODEL)
    assert bool(jnp.all(jnp.isfinite(out)))

    ref = reference_forward(x, mask, params)
    max_diff = float(jnp.max(jnp.abs(out - ref)))
    assert max_diff < 1e-2, f"mismatch vs pure-JAX reference: {max_diff}"

    print("KERNEL_OK")
</pallas_src>

<mosaic_0001>
module attributes {stable_mosaic.version = 11 : i64} {
  func.func @encoder_layer_kernel(%arg0: memref<2x8x32xf32, #tpu.memory_space<vmem>>, %arg1: memref<16x16xf32, #tpu.memory_space<vmem>>, %arg2: memref<160x96xbf16, #tpu.memory_space<vmem>>, %arg3: memref<8x96xf32, #tpu.memory_space<vmem>>, %arg4: memref<2x8x32xf32, #tpu.memory_space<vmem>>) attributes {dimension_semantics = [], scalar_prefetch = 0 : i64, scratch_operands = 0 : i64, tpu.core_type = #tpu.core_type<tc>} {
    %c0 = arith.constant 0 : index
    %c0_0 = arith.constant 0 : index
    %c0_1 = arith.constant 0 : index
    %0 = vector.load %arg0[%c0, %c0_0, %c0_1] : memref<2x8x32xf32, #tpu.memory_space<vmem>>, vector<2x8x32xf32>
    %1 = vector.shape_cast %0 : vector<2x8x32xf32> to vector<16x32xf32>
    %c0_2 = arith.constant 0 : index
    %c0_3 = arith.constant 0 : index
    %2 = vector.load %arg1[%c0_2, %c0_3] : memref<16x16xf32, #tpu.memory_space<vmem>>, vector<16x16xf32>
    %c0_4 = arith.constant 0 : index
    %c0_5 = arith.constant 0 : index
    %3 = vector.load %arg2[%c0_4, %c0_5] : memref<160x96xbf16, #tpu.memory_space<vmem>>, vector<160x96xbf16>
    %c0_6 = arith.constant 0 : index
    %c0_7 = arith.constant 0 : index
    %4 = vector.load %arg3[%c0_6, %c0_7] : memref<8x96xf32, #tpu.memory_space<vmem>>, vector<8x96xf32>
    %5 = vector.extract_strided_slice %4 {offsets = [0, 0], sizes = [1, 32], strides = [1, 1]} : vector<8x96xf32> to vector<1x32xf32>
    %6 = vector.extract_strided_slice %4 {offsets = [1, 0], sizes = [1, 32], strides = [1, 1]} : vector<8x96xf32> to vector<1x32xf32>
    %7 = vector.extract_strided_slice %4 {offsets = [2, 0], sizes = [1, 96], strides = [1, 1]} : vector<8x96xf32> to vector<1x96xf32>
    %8 = vector.extract_strided_slice %4 {offsets = [3, 0], sizes = [1, 32], strides = [1, 1]} : vector<8x96xf32> to vector<1x32xf32>
    %9 = vector.extract_strided_slice %4 {offsets = [4, 0], sizes = [1, 32], strides = [1, 1]} : vector<8x96xf32> to vector<1x32xf32>
    %10 = vector.extract_strided_slice %4 {offsets = [5, 0], sizes = [1, 32], strides = [1, 1]} : vector<8x96xf32> to vector<1x32xf32>
    %11 = vector.extract_strided_slice %4 {offsets = [6, 0], sizes = [1, 64], strides = [1, 1]} : vector<8x96xf32> to vector<1x64xf32>
    %12 = vector.extract_strided_slice %4 {offsets = [7, 0], sizes = [1, 32], strides = [1, 1]} : vector<8x96xf32> to vector<1x32xf32>
    %13 = vector.extract_strided_slice %3 {offsets = [0, 0], sizes = [32, 96], strides = [1, 1]} : vector<160x96xbf16> to vector<32x96xbf16>
    %14 = vector.extract_strided_slice %3 {offsets = [32, 0], sizes = [32, 32], strides = [1, 1]} : vector<160x96xbf16> to vector<32x32xbf16>
    %15 = vector.extract_strided_slice %3 {offsets = [64, 0], sizes = [32, 64], strides = [1, 1]} : vector<160x96xbf16> to vector<32x64xbf16>
    %16 = vector.extract_strided_slice %3 {offsets = [96, 0], sizes = [64, 32], strides = [1, 1]} : vector<160x96xbf16> to vector<64x32xbf16>
    %cst = arith.constant dense<0.000000e+00> : vector<16xf32>
    %17 = vector.multi_reduction <add>, %1, %cst [1] : vector<16x32xf32> to vector<16xf32>
    %18 = vector.shape_cast %17 : vector<16xf32> to vector<16x1xf32>
    %cst_8 = arith.constant 3.200000e+01 : f32
    %19 = vector.broadcast %cst_8 : f32 to vector<16x1xf32>
    %20 = arith.divf %18, %19 : vector<16x1xf32>
    %21 = arith.mulf %1, %1 : vector<16x32xf32>
    %cst_9 = arith.constant dense<0.000000e+00> : vector<16xf32>
    %22 = vector.multi_reduction <add>, %21, %cst_9 [1] : vector<16x32xf32> to vector<16xf32>
    %23 = vector.shape_cast %22 : vector<16xf32> to vector<16x1xf32>
    %cst_10 = arith.constant 3.200000e+01 : f32
    %24 = vector.broadcast %cst_10 : f32 to vector<16x1xf32>
    %25 = arith.divf %23, %24 : vector<16x1xf32>
    %26 = arith.mulf %20, %20 : vector<16x1xf32>
    %27 = arith.subf %25, %26 : vector<16x1xf32>
    %28 = vector.broadcast %20 : vector<16x1xf32> to vector<16x32xf32>
    %29 = arith.subf %1, %28 : vector<16x32xf32>
    %cst_11 = arith.constant 9.99999997E-7 : f32
    %30 = vector.broadcast %cst_11 : f32 to vector<16x1xf32>
    %31 = arith.addf %27, %30 : vector<16x1xf32>
    %32 = math.rsqrt %31 : vector<16x1xf32>
    %33 = vector.broadcast %32 : vector<16x1xf32> to vector<16x32xf32>
    %34 = arith.mulf %29, %33 : vector<16x32xf32>
    %35 = vector.broadcast %5 : vector<1x32xf32> to vector<16x32xf32>
    %36 = arith.mulf %34, %35 : vector<16x32xf32>
    %37 = vector.broadcast %6 : vector<1x32xf32> to vector<16x32xf32>
    %38 = arith.addf %36, %37 : vector<16x32xf32>
    %39 = arith.truncf %38 : vector<16x32xf32> to vector<16x32xbf16>
    %cst_12 = arith.constant dense<0.000000e+00> : vector<16x96xf32>
    %40 = tpu.matmul %39, %13, %cst_12 {dimension_numbers = #tpu.dot_dimension_numbers<[1], [0], [0], [1], [0, 0, 1, 1], [], []>} : vector<16x32xbf16>, vector<32x96xbf16>, vector<16x96xf32> -> vector<16x96xf32>
    %41 = vector.broadcast %7 : vector<1x96xf32> to vector<16x96xf32>
    %42 = arith.addf %40, %41 : vector<16x96xf32>
    %43 = vector.extract_strided_slice %42 {offsets = [0, 0], sizes = [16, 32], strides = [1, 1]} : vector<16x96xf32> to vector<16x32xf32>
    %44 = arith.truncf %43 : vector<16x32xf32> to vector<16x32xbf16>
    %45 = vector.extract_strided_slice %42 {offsets = [0, 32], sizes = [16, 32], strides = [1, 1]} : vector<16x96xf32> to vector<16x32xf32>
    %46 = vector.extract_strided_slice %42 {offsets = [0, 64], sizes = [16, 32], strides = [1, 1]} : vector<16x96xf32> to vector<16x32xf32>
    %47 = arith.truncf %46 : vector<16x32xf32> to vector<16x32xbf16>
    %48 = tpu.transpose %45, [1, 0] : vector<16x32xf32> -> vector<32x16xf32>
    %49 = vector.extract_strided_slice %44 {offsets = [0, 0], sizes = [16, 8], strides = [1, 1]} : vector<16x32xbf16> to vector<16x8xbf16>
    %50 = vector.extract_strided_slice %48 {offsets = [0, 0], sizes = [8, 16], strides = [1, 1]} : vector<32x16xf32> to vector<8x16xf32>
    %51 = arith.truncf %50 : vector<8x16xf32> to vector<8x16xbf16>
    %cst_13 = arith.constant dense<0.000000e+00> : vector<16x16xf32>
    %52 = tpu.matmul %49, %51, %cst_13 {dimension_numbers = #tpu.dot_dimension_numbers<[1], [0], [0], [1], [0, 0, 1, 1], [], []>} : vector<16x8xbf16>, vector<8x16xbf16>, vector<16x16xf32> -> vector<16x16xf32>
    %53 = arith.addf %52, %2 : vector<16x16xf32>
    %cst_14 = arith.constant dense<0xFF800000> : vector<16xf32>
    %54 = vector.multi_reduction <maximumf>, %53, %cst_14 [1] : vector<16x16xf32> to vector<16xf32>
    %55 = vector.shape_cast %54 : vector<16xf32> to vector<16x1xf32>
    %56 = vector.broadcast %55 : vector<16x1xf32> to vector<16x16xf32>
    %57 = arith.subf %53, %56 : vector<16x16xf32>
    %58 = math.exp %57 : vector<16x16xf32>
    %cst_15 = arith.constant dense<0.000000e+00> : vector<16xf32>
    %59 = vector.multi_reduction <add>, %58, %cst_15 [1] : vector<16x16xf32> to vector<16xf32>
    %60 = vector.shape_cast %59 : vector<16xf32> to vector<16x1xf32>
    %61 = tpu.reciprocal %60 {approx = true} : vector<16x1xf32> -> vector<16x1xf32>
    %62 = arith.truncf %58 : vector<16x16xf32> to vector<16x16xbf16>
    %63 = vector.extract_strided_slice %47 {offsets = [0, 0], sizes = [16, 8], strides = [1, 1]} : vector<16x32xbf16> to vector<16x8xbf16>
    %cst_16 = arith.constant dense<0.000000e+00> : vector<16x8xf32>
    %64 = tpu.matmul %62, %63, %cst_16 {dimension_numbers = #tpu.dot_dimension_numbers<[1], [0], [0], [1], [0, 0, 1, 1], [], []>} : vector<16x16xbf16>, vector<16x8xbf16>, vector<16x8xf32> -> vector<16x8xf32>
    %65 = vector.broadcast %61 : vector<16x1xf32> to vector<16x8xf32>
    %66 = arith.mulf %64, %65 : vector<16x8xf32>
    %67 = arith.truncf %66 : vector<16x8xf32> to vector<16x8xbf16>
    %68 = vector.extract_strided_slice %14 {offsets = [0, 0], sizes = [8, 32], strides = [1, 1]} : vector<32x32xbf16> to vector<8x32xbf16>
    %cst_17 = arith.constant dense<0.000000e+00> : vector<16x32xf32>
    %69 = tpu.matmul %67, %68, %cst_17 {dimension_numbers = #tpu.dot_dimension_numbers<[1], [0], [0], [1], [0, 0, 1, 1], [], []>} : vector<16x8xbf16>, vector<8x32xbf16>, vector<16x32xf32> -> vector<16x32xf32>
    %70 = vector.extract_strided_slice %44 {offsets = [0, 8], sizes = [16, 8], strides = [1, 1]} : vector<16x32xbf16> to vector<16x8xbf16>
    %71 = vector.extract_strided_slice %48 {offsets = [8, 0], sizes = [8, 16], strides = [1, 1]} : vector<32x16xf32> to vector<8x16xf32>
    %72 = arith.truncf %71 : vector<8x16xf32> to vector<8x16xbf16>
    %cst_18 = arith.constant dense<0.000000e+00> : vector<16x16xf32>
    %73 = tpu.matmul %70, %72, %cst_18 {dimension_numbers = #tpu.dot_dimension_numbers<[1], [0], [0], [1], [0, 0, 1, 1], [], []>} : vector<16x8xbf16>, vector<8x16xbf16>, vector<16x16xf32> -> vector<16x16xf32>
    %74 = arith.addf %73, %2 : vector<16x16xf32>
    %cst_19 = arith.constant dense<0xFF800000> : vector<16xf32>
    %75 = vector.multi_reduction <maximumf>, %74, %cst_19 [1] : vector<16x16xf32> to vector<16xf32>
    %76 = vector.shape_cast %75 : vector<16xf32> to vector<16x1xf32>
    %77 = vector.broadcast %76 : vector<16x1xf32> to vector<16x16xf32>
    %78 = arith.subf %74, %77 : vector<16x16xf32>
    %79 = math.exp %78 : vector<16x16xf32>
    %cst_20 = arith.constant dense<0.000000e+00> : vector<16xf32>
    %80 = vector.multi_reduction <add>, %79, %cst_20 [1] : vector<16x16xf32> to vector<16xf32>
    %81 = vector.shape_cast %80 : vector<16xf32> to vector<16x1xf32>
    %82 = tpu.reciprocal %81 {approx = true} : vector<16x1xf32> -> vector<16x1xf32>
    %83 = arith.truncf %79 : vector<16x16xf32> to vector<16x16xbf16>
    %84 = vector.extract_strided_slice %47 {offsets = [0, 8], sizes = [16, 8], strides = [1, 1]} : vector<16x32xbf16> to vector<16x8xbf16>
    %cst_21 = arith.constant dense<0.000000e+00> : vector<16x8xf32>
    %85 = tpu.matmul %83, %84, %cst_21 {dimension_numbers = #tpu.dot_dimension_numbers<[1], [0], [0], [1], [0, 0, 1, 1], [], []>} : vector<16x16xbf16>, vector<16x8xbf16>, vector<16x8xf32> -> vector<16x8xf32>
    %86 = vector.broadcast %82 : vector<16x1xf32> to vector<16x8xf32>
    %87 = arith.mulf %85, %86 : vector<16x8xf32>
    %88 = arith.truncf %87 : vector<16x8xf32> to vector<16x8xbf16>
    %89 = vector.extract_strided_slice %14 {offsets = [8, 0], sizes = [8, 32], strides = [1, 1]} : vector<32x32xbf16> to vector<8x32xbf16>
    %cst_22 = arith.constant dense<0.000000e+00> : vector<16x32xf32>
    %90 = tpu.matmul %88, %89, %cst_22 {dimension_numbers = #tpu.dot_dimension_numbers<[1], [0], [0], [1], [0, 0, 1, 1], [], []>} : vector<16x8xbf16>, vector<8x32xbf16>, vector<16x32xf32> -> vector<16x32xf32>
    %91 = arith.addf %69, %90 : vector<16x32xf32>
    %92 = vector.extract_strided_slice %44 {offsets = [0, 16], sizes = [16, 8], strides = [1, 1]} : vector<16x32xbf16> to vector<16x8xbf16>
    %93 = vector.extract_strided_slice %48 {offsets = [16, 0], sizes = [8, 16], strides = [1, 1]} : vector<32x16xf32> to vector<8x16xf32>
    %94 = arith.truncf %93 : vector<8x16xf32> to vector<8x16xbf16>
    %cst_23 = arith.constant dense<0.000000e+00> : vector<16x16xf32>
    %95 = tpu.matmul %92, %94, %cst_23 {dimension_numbers = #tpu.dot_dimension_numbers<[1], [0], [0], [1], [0, 0, 1, 1], [], []>} : vector<16x8xbf16>, vector<8x16xbf16>, vector<16x16xf32> -> vector<16x16xf32>
    %96 = arith.addf %95, %2 : vector<16x16xf32>
    %cst_24 = arith.constant dense<0xFF800000> : vector<16xf32>
    %97 = vector.multi_reduction <maximumf>, %96, %cst_24 [1] : vector<16x16xf32> to vector<16xf32>
    %98 = vector.shape_cast %97 : vector<16xf32> to vector<16x1xf32>
    %99 = vector.broadcast %98 : vector<16x1xf32> to vector<16x16xf32>
    %100 = arith.subf %96, %99 : vector<16x16xf32>
    %101 = math.exp %100 : vector<16x16xf32>
    %cst_25 = arith.constant dense<0.000000e+00> : vector<16xf32>
    %102 = vector.multi_reduction <add>, %101, %cst_25 [1] : vector<16x16xf32> to vector<16xf32>
    %103 = vector.shape_cast %102 : vector<16xf32> to vector<16x1xf32>
    %104 = tpu.reciprocal %103 {approx = true} : vector<16x1xf32> -> vector<16x1xf32>
    %105 = arith.truncf %101 : vector<16x16xf32> to vector<16x16xbf16>
    %106 = vector.extract_strided_slice %47 {offsets = [0, 16], sizes = [16, 8], strides = [1, 1]} : vector<16x32xbf16> to vector<16x8xbf16>
    %cst_26 = arith.constant dense<0.000000e+00> : vector<16x8xf32>
    %107 = tpu.matmul %105, %106, %cst_26 {dimension_numbers = #tpu.dot_dimension_numbers<[1], [0], [0], [1], [0, 0, 1, 1], [], []>} : vector<16x16xbf16>, vector<16x8xbf16>, vector<16x8xf32> -> vector<16x8xf32>
    %108 = vector.broadcast %104 : vector<16x1xf32> to vector<16x8xf32>
    %109 = arith.mulf %107, %108 : vector<16x8xf32>
    %110 = arith.truncf %109 : vector<16x8xf32> to vector<16x8xbf16>
    %111 = vector.extract_strided_slice %14 {offsets = [16, 0], sizes = [8, 32], strides = [1, 1]} : vector<32x32xbf16> to vector<8x32xbf16>
    %cst_27 = arith.constant dense<0.000000e+00> : vector<16x32xf32>
    %112 = tpu.matmul %110, %111, %cst_27 {dimension_numbers = #tpu.dot_dimension_numbers<[1], [0], [0], [1], [0, 0, 1, 1], [], []>} : vector<16x8xbf16>, vector<8x32xbf16>, vector<16x32xf32> -> vector<16x32xf32>
    %113 = arith.addf %91, %112 : vector<16x32xf32>
    %114 = vector.extract_strided_slice %44 {offsets = [0, 24], sizes = [16, 8], strides = [1, 1]} : vector<16x32xbf16> to vector<16x8xbf16>
    %115 = vector.extract_strided_slice %48 {offsets = [24, 0], sizes = [8, 16], strides = [1, 1]} : vector<32x16xf32> to vector<8x16xf32>
    %116 = arith.truncf %115 : vector<8x16xf32> to vector<8x16xbf16>
    %cst_28 = arith.constant dense<0.000000e+00> : vector<16x16xf32>
    %117 = tpu.matmul %114, %116, %cst_28 {dimension_numbers = #tpu.dot_dimension_numbers<[1], [0], [0], [1], [0, 0, 1, 1], [], []>} : vector<16x8xbf16>, vector<8x16xbf16>, vector<16x16xf32> -> vector<16x16xf32>
    %118 = arith.addf %117, %2 : vector<16x16xf32>
    %cst_29 = arith.constant dense<0xFF800000> : vector<16xf32>
    %119 = vector.multi_reduction <maximumf>, %118, %cst_29 [1] : vector<16x16xf32> to vector<16xf32>
    %120 = vector.shape_cast %119 : vector<16xf32> to vector<16x1xf32>
    %121 = vector.broadcast %120 : vector<16x1xf32> to vector<16x16xf32>
    %122 = arith.subf %118, %121 : vector<16x16xf32>
    %123 = math.exp %122 : vector<16x16xf32>
    %cst_30 = arith.constant dense<0.000000e+00> : vector<16xf32>
    %124 = vector.multi_reduction <add>, %123, %cst_30 [1] : vector<16x16xf32> to vector<16xf32>
    %125 = vector.shape_cast %124 : vector<16xf32> to vector<16x1xf32>
    %126 = tpu.reciprocal %125 {approx = true} : vector<16x1xf32> -> vector<16x1xf32>
    %127 = arith.truncf %123 : vector<16x16xf32> to vector<16x16xbf16>
    %128 = vector.extract_strided_slice %47 {offsets = [0, 24], sizes = [16, 8], strides = [1, 1]} : vector<16x32xbf16> to vector<16x8xbf16>
    %cst_31 = arith.constant dense<0.000000e+00> : vector<16x8xf32>
    %129 = tpu.matmul %127, %128, %cst_31 {dimension_numbers = #tpu.dot_dimension_numbers<[1], [0], [0], [1], [0, 0, 1, 1], [], []>} : vector<16x16xbf16>, vector<16x8xbf16>, vector<16x8xf32> -> vector<16x8xf32>
    %130 = vector.broadcast %126 : vector<16x1xf32> to vector<16x8xf32>
    %131 = arith.mulf %129, %130 : vector<16x8xf32>
    %132 = arith.truncf %131 : vector<16x8xf32> to vector<16x8xbf16>
    %133 = vector.extract_strided_slice %14 {offsets = [24, 0], sizes = [8, 32], strides = [1, 1]} : vector<32x32xbf16> to vector<8x32xbf16>
    %cst_32 = arith.constant dense<0.000000e+00> : vector<16x32xf32>
    %134 = tpu.matmul %132, %133, %cst_32 {dimension_numbers = #tpu.dot_dimension_numbers<[1], [0], [0], [1], [0, 0, 1, 1], [], []>} : vector<16x8xbf16>, vector<8x32xbf16>, vector<16x32xf32> -> vector<16x32xf32>
    %135 = arith.addf %113, %134 : vector<16x32xf32>
    %136 = vector.broadcast %8 : vector<1x32xf32> to vector<16x32xf32>
    %137 = arith.addf %135, %136 : vector<16x32xf32>
    %138 = arith.addf %137, %1 : vector<16x32xf32>
    %cst_33 = arith.constant dense<0.000000e+00> : vector<16xf32>
    %139 = vector.multi_reduction <add>, %138, %cst_33 [1] : vector<16x32xf32> to vector<16xf32>
    %140 = vector.shape_cast %139 : vector<16xf32> to vector<16x1xf32>
    %cst_34 = arith.constant 3.200000e+01 : f32
    %141 = vector.broadcast %cst_34 : f32 to vector<16x1xf32>
    %142 = arith.divf %140, %141 : vector<16x1xf32>
    %143 = arith.mulf %138, %138 : vector<16x32xf32>
    %cst_35 = arith.constant dense<0.000000e+00> : vector<16xf32>
    %144 = vector.multi_reduction <add>, %143, %cst_35 [1] : vector<16x32xf32> to vector<16xf32>
    %145 = vector.shape_cast %144 : vector<16xf32> to vector<16x1xf32>
    %cst_36 = arith.constant 3.200000e+01 : f32
    %146 = vector.broadcast %cst_36 : f32 to vector<16x1xf32>
    %147 = arith.divf %145, %146 : vector<16x1xf32>
    %148 = arith.mulf %142, %142 : vector<16x1xf32>
    %149 = arith.subf %147, %148 : vector<16x1xf32>
    %150 = vector.broadcast %142 : vector<16x1xf32> to vector<16x32xf32>
    %151 = arith.subf %138, %150 : vector<16x32xf32>
    %cst_37 = arith.constant 9.99999997E-7 : f32
    %152 = vector.broadcast %cst_37 : f32 to vector<16x1xf32>
    %153 = arith.addf %149, %152 : vector<16x1xf32>
    %154 = math.rsqrt %153 : vector<16x1xf32>
    %155 = vector.broadcast %154 : vector<16x1xf32> to vector<16x32xf32>
    %156 = arith.mulf %151, %155 : vector<16x32xf32>
    %157 = vector.broadcast %9 : vector<1x32xf32> to vector<16x32xf32>
    %158 = arith.mulf %156, %157 : vector<16x32xf32>
    %159 = vector.broadcast %10 : vector<1x32xf32> to vector<16x32xf32>
    %160 = arith.addf %158, %159 : vector<16x32xf32>
    %161 = arith.truncf %160 : vector<16x32xf32> to vector<16x32xbf16>
    %cst_38 = arith.constant dense<0.000000e+00> : vector<16x64xf32>
    %162 = tpu.matmul %161, %15, %cst_38 {dimension_numbers = #tpu.dot_dimension_numbers<[1], [0], [0], [1], [0, 0, 1, 1], [], []>} : vector<16x32xbf16>, vector<32x64xbf16>, vector<16x64xf32> -> vector<16x64xf32>
    %163 = vector.broadcast %11 : vector<1x64xf32> to vector<16x64xf32>
    %164 = arith.addf %162, %163 : vector<16x64xf32>
    %cst_39 = arith.constant 0.000000e+00 : f32
    %165 = vector.broadcast %cst_39 : f32 to vector<16x64xf32>
    %166 = arith.maximumf %164, %165 : vector<16x64xf32>
    %167 = arith.truncf %166 : vector<16x64xf32> to vector<16x64xbf16>
    %cst_40 = arith.constant dense<0.000000e+00> : vector<16x32xf32>
    %168 = tpu.matmul %167, %16, %cst_40 {dimension_numbers = #tpu.dot_dimension_numbers<[1], [0], [0], [1], [0, 0, 1, 1], [], []>} : vector<16x64xbf16>, vector<64x32xbf16>, vector<16x32xf32> -> vector<16x32xf32>
    %169 = vector.broadcast %12 : vector<1x32xf32> to vector<16x32xf32>
    %170 = arith.addf %168, %169 : vector<16x32xf32>
    %171 = arith.addf %170, %138 : vector<16x32xf32>
    %172 = vector.shape_cast %171 : vector<16x32xf32> to vector<2x8x32xf32>
    %c0_41 = arith.constant 0 : index
    %c0_42 = arith.constant 0 : index
    %c0_43 = arith.constant 0 : index
    %173 = vector.load %arg4[%c0_41, %c0_42, %c0_43] : memref<2x8x32xf32, #tpu.memory_space<vmem>>, vector<2x8x32xf32>
    tpu.vector_store %arg4[%c0_41, %c0_42, %c0_43], %172 {strides = array<i32>} : memref<2x8x32xf32, #tpu.memory_space<vmem>>, vector<2x8x32xf32>,
    return
  }
}

</mosaic_0001>

<llo_original>
// kernel: transformer_encoder_layer.1
$region0: #{transformer_encoder_layer.1}
  #allocation0 [shape = 'u32[]', space=smem, size = 0x4, offset = 0x4, fixed_abs, tag = 'smem constant byte address 0x4 - core index']
  #allocation1 [shape = 'u32[144,128]{1,0:T(1,128)}', space=vmem, size = 0x12000, scoped, tag = 'internal scratch']
  %s0 = inlined_call_operand.hbm [shape: f32[2,8,32], index: 0, kind: input, shape index: {}]
  %s1 = inlined_call_operand.hbm [shape: f32[16,16], index: 1, kind: input, shape index: {}]
  %s2 = inlined_call_operand.hbm [shape: bf16[160,96], index: 2, kind: input, shape index: {}]
  %s3 = inlined_call_operand.hbm [shape: f32[8,96], index: 3, kind: input, shape index: {}]
  %s4 = inlined_call_operand.hbm [shape: f32[2,8,32], index: 4, kind: output, shape index: {}]
  %s5 = sld [smem:[#allocation0]]
  $region42: #{transformer_encoder_layer.1} parent=0
    _
  %s7 = ssub.s32 1, %s5
  %s8 = scalar_select 0, %s7, %s5
  $region1: #{transformer_encoder_layer.1} parent=0
    #allocation2 [shape = 'u8[8192]{0}', space=vmem, size = 0x2000, scoped, tag = 'input window, operand 0, single buffered']
    #allocation3 [shape = 's32[1]{0}', space=sflag, size = 0x4, scoped, tag = 'scoped memory for transformer_encoder_layer.1']
    #allocation4 [shape = 's32[1]{0}', space=sflag, size = 0x4, scoped, tag = 'scoped memory for transformer_encoder_layer.1']
    #allocation5 [shape = 'u8[8192]{0}', space=vmem, size = 0x2000, scoped, tag = 'input window, operand 1, single buffered']
    #allocation6 [shape = 's32[1]{0}', space=sflag, size = 0x4, scoped, tag = 'scoped memory for transformer_encoder_layer.1']
    #allocation7 [shape = 'u8[40960]{0}', space=vmem, size = 0xa000, scoped, tag = 'input window, operand 2, single buffered']
    #allocation8 [shape = 'u8[4096]{0}', space=vmem, size = 0x1000, scoped, tag = 'input window, operand 3, single buffered']
    #allocation9 [shape = 's32[1]{0}', space=sflag, size = 0x4, scoped, tag = 'scoped memory for transformer_encoder_layer.1']
    #allocation10 [shape = 'u8[8192]{0}', space=vmem, size = 0x2000, scoped, tag = 'output window, operand 0, single buffered']
    %9 = vsyncpa [#allocation3], 0
    %10 = vsyncpa [#allocation6], 0
    %11 = vsyncpa [#allocation9], 0
    %12 = vsyncpa [#allocation4], 0
    // Predicated region
    $region2: #{transformer_encoder_layer.1} parent=1 // pred_check
      _
    $region3: #{transformer_encoder_layer.1} parent=1 // pred_check_branch
      %14 = sbr.rel (0) target = $region5
    $region4: #{transformer_encoder_layer.1} parent=1 // pred_region
      %s16 = ssub.s32 256, 256
      %17 = vsyncadd [#allocation3], %s16
      %s18 = sshll.u32 [#allocation2], 4
      %s19 = int_to_ptr.vmem [resolvable:$true] %s18
      %24 = dma.hbm_to_vmem [thread:$0]  %s0, 256, %s19, [#allocation3], 128, 128, 8
    $region5: #{transformer_encoder_layer.1} parent=1 // pred_fallthru
      _
    // Predicated region
    $region6: #{transformer_encoder_layer.1} parent=1 // pred_check
      _
    $region7: #{transformer_encoder_layer.1} parent=1 // pred_check_branch
      %26 = sbr.rel (0) target = $region9
    $region8: #{transformer_encoder_layer.1} parent=1 // pred_region
      %s28 = ssub.s32 256, 256
      %29 = vsyncadd [#allocation6], %s28
      %s30 = sshll.u32 [#allocation5], 4
      %s31 = int_to_ptr.vmem [resolvable:$true] %s30
      %36 = dma.hbm_to_vmem [thread:$0]  %s1, 256, %s31, [#allocation6], 128, 128, 8
    $region9: #{transformer_encoder_layer.1} parent=1 // pred_fallthru
      _
    // Predicated region
    $region10: #{transformer_encoder_layer.1} parent=1 // pred_check
      _
    $region11: #{transformer_encoder_layer.1} parent=1 // pred_check_branch
      %38 = sbr.rel (0) target = $region13
    $region12: #{transformer_encoder_layer.1} parent=1 // pred_region
      %s40 = ssub.s32 1280, 1280
      %41 = vsyncadd [#allocation6], %s40
      %s42 = sshll.u32 [#allocation7], 4
      %s43 = int_to_ptr.vmem [resolvable:$true] %s42
      %48 = dma.hbm_to_vmem [thread:$0]  %s2, 1280, %s43, [#allocation6], 64, 64, 4
    $region13: #{transformer_encoder_layer.1} parent=1 // pred_fallthru
      _
    // Predicated region
    $region14: #{transformer_encoder_layer.1} parent=1 // pred_check
      _
    $region15: #{transformer_encoder_layer.1} parent=1 // pred_check_branch
      %50 = sbr.rel (0) target = $region17
    $region16: #{transformer_encoder_layer.1} parent=1 // pred_region
      %s52 = ssub.s32 128, 128
      %53 = vsyncadd [#allocation9], %s52
      %s55 = sshll.u32 [#allocation8], 4
      %s56 = int_to_ptr.vmem [resolvable:$true] %s55
      %58 = dma.hbm_to_vmem [thread:$0]  %s3, 128, %s56, [#allocation9]
    $region17: #{transformer_encoder_layer.1} parent=1 // pred_fallthru
      _
    // Predicated region
    $region18: #{transformer_encoder_layer.1} parent=1 // pred_check
      _
    $region19: #{transformer_encoder_layer.1} parent=1 // pred_check_branch
      %60 = sbr.rel (0) target = $region21
    $region20: #{transformer_encoder_layer.1} parent=1 // pred_region
      %61 = dma.done [#allocation3], 256
    $region21: #{transformer_encoder_layer.1} parent=1 // pred_fallthru
      _
    // Predicated region
    $region22: #{transformer_encoder_layer.1} parent=1 // pred_check
      _
    $region23: #{transformer_encoder_layer.1} parent=1 // pred_check_branch
      %63 = sbr.rel (0) target = $region25
    $region24: #{transformer_encoder_layer.1} parent=1 // pred_region
      %64 = dma.done [#allocation6], 256
    $region25: #{transformer_encoder_layer.1} parent=1 // pred_fallthru
      _
    // Predicated region
    $region26: #{transformer_encoder_layer.1} parent=1 // pred_check
      _
    $region27: #{transformer_encoder_layer.1} parent=1 // pred_check_branch
      %66 = sbr.rel (0) target = $region29
    $region28: #{transformer_encoder_layer.1} parent=1 // pred_region
      %67 = dma.done [#allocation6], 1280
    $region29: #{transformer_encoder_layer.1} parent=1 // pred_fallthru
      _
    // Predicated region
    $region30: #{transformer_encoder_layer.1} parent=1 // pred_check
      _
    $region31: #{transformer_encoder_layer.1} parent=1 // pred_check_branch
      %69 = sbr.rel (0) target = $region33
    $region32: #{transformer_encoder_layer.1} parent=1 // pred_region
      %70 = dma.done [#allocation9], 128
    $region33: #{transformer_encoder_layer.1} parent=1 // pred_fallthru
      _
    %v72 = vld [vmem:[#allocation2] sm:$0xff]
    %v73 = vld [vmem:[#allocation2 + $0x8] sm:$0xff]
    %v74 = vld [vmem:[#allocation5] sm:$0xff]
    %v75 = vld [vmem:[#allocation5 + $0x8] sm:$0xff]
    %v76 = vld [vmem:[#allocation7] sm:$0xf]
    %v77 = vld [vmem:[#allocation7 + $0x4] sm:$0xf]
    %v78 = vld [vmem:[#allocation7 + $0x8] sm:$0xf]
    %v79 = vld [vmem:[#allocation7 + $0xc] sm:$0xf]
    %v80 = vld [vmem:[#allocation7 + $0x10] sm:$0xf]
    %v81 = vld [vmem:[#allocation7 + $0x14] sm:$0xf]
    %v82 = vld [vmem:[#allocation7 + $0x18] sm:$0xf]
    %v83 = vld [vmem:[#allocation7 + $0x1c] sm:$0xf]
    %v84 = vld [vmem:[#allocation7 + $0x20] sm:$0xf]
    %v85 = vld [vmem:[#allocation7 + $0x24] sm:$0xf]
    %v86 = vld [vmem:[#allocation7 + $0x28] sm:$0xf]
    %v87 = vld [vmem:[#allocation7 + $0x2c] sm:$0xf]
    %v88 = vld [vmem:[#allocation7 + $0x30] sm:$0xf]
    %v89 = vld [vmem:[#allocation7 + $0x34] sm:$0xf]
    %v90 = vld [vmem:[#allocation7 + $0x38] sm:$0xf]
    %v91 = vld [vmem:[#allocation7 + $0x3c] sm:$0xf]
    %v92 = vld [vmem:[#allocation7 + $0x40] sm:$0xf]
    %v93 = vld [vmem:[#allocation7 + $0x44] sm:$0xf]
    %v94 = vld [vmem:[#allocation7 + $0x48] sm:$0xf]
    %v95 = vld [vmem:[#allocation7 + $0x4c] sm:$0xf]
    %v96 = vld [vmem:[#allocation8] sm:$0xff]
    %vm97 = vcmask 261120
    %v98 = vsel %vm97, %v72, 0.0
    %99 = vadd.xlane.f32.xlu0 %v98
    %v100 = vpop.xlane.xlu0 %99
    %v101 = vsel %vm97, %v73, 0.0
    %102 = vadd.xlane.f32.xlu0 %v101
    %v103 = vpop.xlane.xlu0 %102
    %v104 = vrcp.pop 32.0
    %v105 = vmul.f32 %v100, %v104
    %v106 = vmul.f32 %v103, %v104
    %v107 = vmul.f32 %v72, %v72
    %v108 = vmul.f32 %v73, %v73
    %v109 = vsel %vm97, %v107, 0.0
    %110 = vadd.xlane.f32.xlu0 %v109
    %v111 = vpop.xlane.xlu0 %110
    %v112 = vsel %vm97, %v108, 0.0
    %113 = vadd.xlane.f32.xlu0 %v112
    %v114 = vpop.xlane.xlu0 %113
    %v115 = vmul.f32 %v111, %v104
    %v116 = vmul.f32 %v114, %v104
    %v117 = vmul.f32 %v105, %v105
    %v118 = vmul.f32 %v106, %v106
    %v119 = vsub.f32 %v115, %v117
    %v120 = vsub.f32 %v116, %v118
    %v121 = vsub.f32 %v72, %v105
    %v122 = vsub.f32 %v73, %v106
    %v123 = vadd.f32 %v119, 1e-06
    %v124 = vadd.f32 %v120, 1e-06
    %v125 = vrsqrt.pop %v123
    %v126 = vrsqrt.pop %v124
    %v127 = vmul.f32 %v121, %v125
    %v128 = vmul.f32 %v122, %v126
    %v129 = vlaneseq
    %v130 = vshrl.u32 %v129, 7
    %v131 = vsub.s32 0, %v130
    %v132 = vrot.slane %v96, %v131
    %v133 = vmul.f32 %v127, %v132
    %v134 = vmul.f32 %v128, %v132
    %v135 = vlaneseq
    %v136 = vshrl.u32 %v135, 7
    %v137 = vsub.s32 1, %v136
    %v138 = vrot.slane %v96, %v137
    %v139 = vadd.f32 %v133, %v138
    %v140 = vadd.f32 %v134, %v138
    %v141 = vpack.c.bf16 %v140, %v139
    %v142 = vlaneseq
    %v143 = vshrl.u32 %v142, 7
    %v144 = vsub.s32 2, %v143
    %v145 = vrot.slane %v96, %v144
    %v150 = vunpack.c.l.b16 %v76
    %v151 = vunpack.c.l.b16 %v77
    %v152 = vunpack.c.l.b16 %v78
    %v153 = vunpack.c.l.b16 %v79
    %v154 = vpack.c.b16 %v151, %v150
    %v155 = vpack.c.b16 %v153, %v152
    %v159 = vsel %vm97, %v141, 0
    %161 = vmatprep.subr.bf16.mxu0 0
    %162 = vmatpush1.bf16.msra.mxu0 0
    %163 = vmatprep.subr.bf16.mxu0 0
    %164 = vmatpush1.bf16.msra.mxu0 0
    %165 = vmatprep.subr.bf16.mxu0 0
    %166 = vmatpush1.bf16.msra.mxu0 0
    %167 = vmatprep.subr.bf16.mxu0 0
    %168 = vmatpush1.bf16.msra.mxu0 0
    %169 = vmatprep.subr.bf16.mxu0 0
    %170 = vmatpush1.bf16.msra.mxu0 0
    %171 = vmatprep.subr.bf16.mxu0 0
    %172 = vmatpush1.bf16.msra.mxu0 0
    %173 = vmatprep.subr.bf16.mxu0 0
    %174 = vmatpush1.bf16.msra.mxu0 %v155
    %175 = vmatprep.subr.bf16.mxu0 0
    %176 = vmatpush1.bf16.msra.mxu0 %v154
    %177 = vmatprep.subr.bf16.mxu0 0
    %178 = vmatpush2.bf16.msra.mxu0 0
    %179 = vmatprep.subr.bf16.mxu0 0
    %180 = vmatpush2.bf16.msra.mxu0 0
    %181 = vmatprep.subr.bf16.mxu0 0
    %182 = vmatpush2.bf16.msra.mxu0 0
    %183 = vmatprep.subr.bf16.mxu0 0
    %184 = vmatpush2.bf16.msra.mxu0 0
    %185 = vmatprep.subr.bf16.mxu0 0
    %186 = vmatpush2.bf16.msra.mxu0 0
    %187 = vmatprep.subr.bf16.mxu0 0
    %188 = vmatpush2.bf16.msra.mxu0 0
    %189 = vmatprep.subr.bf16.mxu0 0
    %190 = vmatpush2.bf16.msra.mxu0 0
    %191 = vmatprep.subr.bf16.mxu0 0
    %192 = vmatpush2.bf16.msra.mxu0 0
    %193 = vmatprep.mubr.bf16.mxu0 0
    %194 = vmatmul.mubr.bf16.gmra.mxu0 %v159
    %v195 = vpop.f32.mrf.mxu0
    %v196 = vadd.f32 %v145, %v195
    %v197 = vpop.f32.mrf.mxu0
    %v198 = vpop.f32.mrf.mxu0
    %v199 = vadd.f32 %v145, %v198
    %v200 = vpop.f32.mrf.mxu0
    %201 = vdwg.mxu0
    %v202 = vpack.c.bf16 %v199, %v196
    %205 = vrot.lane.b32.xlu0 %v196, 96
    %v206 = vpop.permute.xlu0 %205
    %207 = vrot.lane.b32.xlu0 %v199, 96
    %v208 = vpop.permute.xlu0 %207
    %211 = vxpose.xlu0.b32.start [1/16] %v206, 128
    %212 = vxpose.xlu0.b32.cont [2/16] %v208, 128
    %213 = vxpose.xlu0.b32.cont [3/16] 0.0, 128
    %214 = vxpose.xlu0.b32.cont [4/16] 0.0, 128
    %215 = vxpose.xlu0.b32.cont [5/16] 0.0, 128
    %216 = vxpose.xlu0.b32.cont [6/16] 0.0, 128
    %217 = vxpose.xlu0.b32.cont [7/16] 0.0, 128
    %218 = vxpose.xlu0.b32.cont [8/16] 0.0, 128
    %219 = vxpose.xlu0.b32.cont [9/16] 0.0, 128
    %220 = vxpose.xlu0.b32.cont [10/16] 0.0, 128
    %221 = vxpose.xlu0.b32.cont [11/16] 0.0, 128
    %222 = vxpose.xlu0.b32.cont [12/16] 0.0, 128
    %223 = vxpose.xlu0.b32.cont [13/16] 0.0, 128
    %224 = vxpose.xlu0.b32.cont [14/16] 0.0, 128
    %225 = vxpose.xlu0.b32.cont [15/16] 0.0, 128
    %226 = vxpose.xlu0.b32.end [16/16] 0.0, 128
    %v227 = vpop.trf.xlu0
    %v228 = vpop.trf.xlu0
    %v229 = vpop.trf.xlu0
    %v230 = vpop.trf.xlu0
    %v231 = vpop.trf.xlu0
    %v232 = vpop.trf.xlu0
    %v233 = vpop.trf.xlu0
    %v234 = vpop.trf.xlu0
    %v235 = vpop.trf.xlu0
    %v236 = vpop.trf.xlu0
    %v237 = vpop.trf.xlu0
    %v238 = vpop.trf.xlu0
    %v239 = vpop.trf.xlu0
    %v240 = vpop.trf.xlu0
    %v241 = vpop.trf.xlu0
    %v242 = vpop.trf.xlu0
    %v243 = vpack.c.bf16 %v227, %v227
    %vm244 = vcmask 64512
    %v246 = vsel %vm244, %v202, 0
    %vm248 = vcmask 1043456
    %v250 = vsel %vm248, %v243, 0
    %252 = vmatprep.subr.bf16.mxu0 0
    %253 = vmatpush1.bf16.msra.mxu0 0
    %254 = vmatprep.subr.bf16.mxu0 0
    %255 = vmatpush1.bf16.msra.mxu0 0
    %256 = vmatprep.subr.bf16.mxu0 0
    %257 = vmatpush1.bf16.msra.mxu0 0
    %258 = vmatprep.subr.bf16.mxu0 0
    %259 = vmatpush1.bf16.msra.mxu0 0
    %260 = vmatprep.subr.bf16.mxu0 0
    %261 = vmatpush1.bf16.msra.mxu0 0
    %262 = vmatprep.subr.bf16.mxu0 0
    %263 = vmatpush1.bf16.msra.mxu0 0
    %264 = vmatprep.subr.bf16.mxu0 0
    %265 = vmatpush1.bf16.msra.mxu0 0
    %266 = vmatprep.subr.bf16.mxu0 0
    %267 = vmatpush1.bf16.msra.mxu0 %v250
    %268 = vmatprep.subr.bf16.mxu0 0
    %269 = vmatpush2.bf16.msra.mxu0 0
    %270 = vmatprep.subr.bf16.mxu0 0
    %271 = vmatpush2.bf16.msra.mxu0 0
    %272 = vmatprep.subr.bf16.mxu0 0
    %273 = vmatpush2.bf16.msra.mxu0 0
    %274 = vmatprep.subr.bf16.mxu0 0
    %275 = vmatpush2.bf16.msra.mxu0 0
    %276 = vmatprep.subr.bf16.mxu0 0
    %277 = vmatpush2.bf16.msra.mxu0 0
    %278 = vmatprep.subr.bf16.mxu0 0
    %279 = vmatpush2.bf16.msra.mxu0 0
    %280 = vmatprep.subr.bf16.mxu0 0
    %281 = vmatpush2.bf16.msra.mxu0 0
    %282 = vmatprep.subr.bf16.mxu0 0
    %283 = vmatpush2.bf16.msra.mxu0 0
    %284 = vmatprep.mubr.bf16.mxu0 0
    %285 = vmatmul.mubr.bf16.gmra.mxu0 %v246
    %v286 = vpop.f32.mrf.mxu0
    %v287 = vadd.f32 %v74, %v286
    %v288 = vpop.f32.mrf.mxu0
    %v289 = vpop.f32.mrf.mxu0
    %v290 = vadd.f32 %v75, %v289
    %v291 = vpop.f32.mrf.mxu0
    %292 = vdwg.mxu0
    %vm293 = vcmask 130048
    %v294 = vsel %vm293, %v287, -inf
    %295 = vmax.xlane.f32.xlu0 %v294
    %v296 = vpop.xlane.xlu0 %295
    %v297 = vsel %vm293, %v290, -inf
    %298 = vmax.xlane.f32.xlu0 %v297
    %v299 = vpop.xlane.xlu0 %298
    %v300 = vsub.f32 %v287, %v296
    %v301 = vsub.f32 %v290, %v299
    %v302 = vmul.f32 %v300, 1.442695
    %v303 = vpow.pop %v302
    %v304 = vmul.f32 %v301, 1.442695
    %v305 = vpow.pop %v304
    %v306 = vsel %vm293, %v303, 0.0
    %307 = vadd.xlane.f32.xlu0 %v306
    %v308 = vpop.xlane.xlu0 %307
    %v309 = vsel %vm293, %v305, 0.0
    %310 = vadd.xlane.f32.xlu0 %v309
    %v311 = vpop.xlane.xlu0 %310
    %v312 = vrcp.pop %v308
    %v313 = vrcp.pop %v311
    %v314 = vpack.c.bf16 %v305, %v303
    %316 = vrot.lane.b32.xlu0 %v202, 64
    %v317 = vpop.permute.xlu0 %316
    %v320 = vsel %vm293, %v314, 0
    %322 = vmatprep.subr.bf16.mxu0 0
    %323 = vmatpush1.bf16.msra.mxu0 0
    %324 = vmatprep.subr.bf16.mxu0 0
    %325 = vmatpush1.bf16.msra.mxu0 0
    %326 = vmatprep.subr.bf16.mxu0 0
    %327 = vmatpush1.bf16.msra.mxu0 0
    %328 = vmatprep.subr.bf16.mxu0 0
    %329 = vmatpush1.bf16.msra.mxu0 0
    %330 = vmatprep.subr.bf16.mxu0 0
    %331 = vmatpush1.bf16.msra.mxu0 0
    %332 = vmatprep.subr.bf16.mxu0 0
    %333 = vmatpush1.bf16.msra.mxu0 0
    %334 = vmatprep.subr.bf16.mxu0 0
    %335 = vmatpush1.bf16.msra.mxu0 0
    %336 = vmatprep.subr.bf16.mxu0 0
    %337 = vmatpush1.bf16.msra.mxu0 %v317
    %338 = vmatprep.subr.bf16.mxu0 0
    %339 = vmatpush2.bf16.msra.mxu0 0
    %340 = vmatprep.subr.bf16.mxu0 0
    %341 = vmatpush2.bf16.msra.mxu0 0
    %342 = vmatprep.subr.bf16.mxu0 0
    %343 = vmatpush2.bf16.msra.mxu0 0
    %344 = vmatprep.subr.bf16.mxu0 0
    %345 = vmatpush2.bf16.msra.mxu0 0
    %346 = vmatprep.subr.bf16.mxu0 0
    %347 = vmatpush2.bf16.msra.mxu0 0
    %348 = vmatprep.subr.bf16.mxu0 0
    %349 = vmatpush2.bf16.msra.mxu0 0
    %350 = vmatprep.subr.bf16.mxu0 0
    %351 = vmatpush2.bf16.msra.mxu0 0
    %352 = vmatprep.subr.bf16.mxu0 0
    %353 = vmatpush2.bf16.msra.mxu0 0
    %354 = vmatprep.mubr.bf16.mxu0 0
    %355 = vmatmul.mubr.bf16.gmra.mxu0 %v320
    %v356 = vpop.f32.mrf.mxu0
    %v357 = vadd.f32 0.0, %v356
    %v358 = vpop.f32.mrf.mxu0
    %v359 = vpop.f32.mrf.mxu0
    %v360 = vadd.f32 0.0, %v359
    %v361 = vpop.f32.mrf.mxu0
    %362 = vdwg.mxu0
    %v363 = vmul.f32 %v357, %v312
    %v364 = vmul.f32 %v360, %v313
    %v365 = vpack.c.bf16 %v364, %v363
    %v366 = vpack.c.bf16 %v228, %v228
    %367 = vrot.lane.b32.xlu0 %v202, 120
    %v368 = vpop.permute.xlu0 %367
    %v370 = vsel %vm244, %v368, 0
    %v373 = vsel %vm248, %v366, 0
    %375 = vmatprep.subr.bf16.mxu0 0
    %376 = vmatpush1.bf16.msra.mxu0 0
    %377 = vmatprep.subr.bf16.mxu0 0
    %378 = vmatpush1.bf16.msra.mxu0 0
    %379 = vmatprep.subr.bf16.mxu0 0
    %380 = vmatpush1.bf16.msra.mxu0 0
    %381 = vmatprep.subr.bf16.mxu0 0
    %382 = vmatpush1.bf16.msra.mxu0 0
    %383 = vmatprep.subr.bf16.mxu0 0
    %384 = vmatpush1.bf16.msra.mxu0 0
    %385 = vmatprep.subr.bf16.mxu0 0
    %386 = vmatpush1.bf16.msra.mxu0 0
    %387 = vmatprep.subr.bf16.mxu0 0
    %388 = vmatpush1.bf16.msra.mxu0 0
    %389 = vmatprep.subr.bf16.mxu0 0
    %390 = vmatpush1.bf16.msra.mxu0 %v373
    %391 = vmatprep.subr.bf16.mxu0 0
    %392 = vmatpush2.bf16.msra.mxu0 0
    %393 = vmatprep.subr.bf16.mxu0 0
    %394 = vmatpush2.bf16.msra.mxu0 0
    %395 = vmatprep.subr.bf16.mxu0 0
    %396 = vmatpush2.bf16.msra.mxu0 0
    %397 = vmatprep.subr.bf16.mxu0 0
    %398 = vmatpush2.bf16.msra.mxu0 0
    %399 = vmatprep.subr.bf16.mxu0 0
    %400 = vmatpush2.bf16.msra.mxu0 0
    %401 = vmatprep.subr.bf16.mxu0 0
    %402 = vmatpush2.bf16.msra.mxu0 0
    %403 = vmatprep.subr.bf16.mxu0 0
    %404 = vmatpush2.bf16.msra.mxu0 0
    %405 = vmatprep.subr.bf16.mxu0 0
    %406 = vmatpush2.bf16.msra.mxu0 0
    %407 = vmatprep.mubr.bf16.mxu0 0
    %408 = vmatmul.mubr.bf16.gmra.mxu0 %v370
    %v409 = vpop.f32.mrf.mxu0
    %v410 = vadd.f32 %v74, %v409
    %v411 = vpop.f32.mrf.mxu0
    %v412 = vpop.f32.mrf.mxu0
    %v413 = vadd.f32 %v75, %v412
    %v414 = vpop.f32.mrf.mxu0
    %415 = vdwg.mxu0
    %v416 = vsel %vm293, %v410, -inf
    %417 = vmax.xlane.f32.xlu0 %v416
    %v418 = vpop.xlane.xlu0 %417
    %v419 = vsel %vm293, %v413, -inf
    %420 = vmax.xlane.f32.xlu0 %v419
    %v421 = vpop.xlane.xlu0 %420
    %v422 = vsub.f32 %v410, %v418
    %v423 = vsub.f32 %v413, %v421
    %v424 = vmul.f32 %v422, 1.442695
    %v425 = vpow.pop %v424
    %v426 = vmul.f32 %v423, 1.442695
    %v427 = vpow.pop %v426
    %v428 = vsel %vm293, %v425, 0.0
    %429 = vadd.xlane.f32.xlu0 %v428
    %v430 = vpop.xlane.xlu0 %429
    %v431 = vsel %vm293, %v427, 0.0
    %432 = vadd.xlane.f32.xlu0 %v431
    %v433 = vpop.xlane.xlu0 %432
    %v434 = vrcp.pop %v430
    %v435 = vrcp.pop %v433
    %v436 = vpack.c.bf16 %v427, %v425
    %437 = vrot.lane.b32.xlu0 %v202, 56
    %v438 = vpop.permute.xlu0 %437
    %v441 = vsel %vm293, %v436, 0
    %443 = vmatprep.subr.bf16.mxu0 0
    %444 = vmatpush1.bf16.msra.mxu0 0
    %445 = vmatprep.subr.bf16.mxu0 0
    %446 = vmatpush1.bf16.msra.mxu0 0
    %447 = vmatprep.subr.bf16.mxu0 0
    %448 = vmatpush1.bf16.msra.mxu0 0
    %449 = vmatprep.subr.bf16.mxu0 0
    %450 = vmatpush1.bf16.msra.mxu0 0
    %451 = vmatprep.subr.bf16.mxu0 0
    %452 = vmatpush1.bf16.msra.mxu0 0
    %453 = vmatprep.subr.bf16.mxu0 0
    %454 = vmatpush1.bf16.msra.mxu0 0
    %455 = vmatprep.subr.bf16.mxu0 0
    %456 = vmatpush1.bf16.msra.mxu0 0
    %457 = vmatprep.subr.bf16.mxu0 0
    %458 = vmatpush1.bf16.msra.mxu0 %v438
    %459 = vmatprep.subr.bf16.mxu0 0
    %460 = vmatpush2.bf16.msra.mxu0 0
    %461 = vmatprep.subr.bf16.mxu0 0
    %462 = vmatpush2.bf16.msra.mxu0 0
    %463 = vmatprep.subr.bf16.mxu0 0
    %464 = vmatpush2.bf16.msra.mxu0 0
    %465 = vmatprep.subr.bf16.mxu0 0
    %466 = vmatpush2.bf16.msra.mxu0 0
    %467 = vmatprep.subr.bf16.mxu0 0
    %468 = vmatpush2.bf16.msra.mxu0 0
    %469 = vmatprep.subr.bf16.mxu0 0
    %470 = vmatpush2.bf16.msra.mxu0 0
    %471 = vmatprep.subr.bf16.mxu0 0
    %472 = vmatpush2.bf16.msra.mxu0 0
    %473 = vmatprep.subr.bf16.mxu0 0
    %474 = vmatpush2.bf16.msra.mxu0 0
    %475 = vmatprep.mubr.bf16.mxu0 0
    %476 = vmatmul.mubr.bf16.gmra.mxu0 %v441
    %v477 = vpop.f32.mrf.mxu0
    %v478 = vadd.f32 0.0, %v477
    %v479 = vpop.f32.mrf.mxu0
    %v480 = vpop.f32.mrf.mxu0
    %v481 = vadd.f32 0.0, %v480
    %v482 = vpop.f32.mrf.mxu0
    %483 = vdwg.mxu0
    %v484 = vmul.f32 %v478, %v434
    %v485 = vmul.f32 %v481, %v435
    %v486 = vpack.c.bf16 %v485, %v484
    %v488 = vsel %vm244, %v486, 0
    %v491 = vsel %vm248, %v81, 0
    %493 = vmatprep.subr.bf16.mxu0 0
    %494 = vmatpush1.bf16.msra.mxu0 0
    %495 = vmatprep.subr.bf16.mxu0 0
    %496 = vmatpush1.bf16.msra.mxu0 0
    %497 = vmatprep.subr.bf16.mxu0 0
    %498 = vmatpush1.bf16.msra.mxu0 0
    %499 = vmatprep.subr.bf16.mxu0 0
    %500 = vmatpush1.bf16.msra.mxu0 0
    %501 = vmatprep.subr.bf16.mxu0 0
    %502 = vmatpush1.bf16.msra.mxu0 0
    %503 = vmatprep.subr.bf16.mxu0 0
    %504 = vmatpush1.bf16.msra.mxu0 0
    %505 = vmatprep.subr.bf16.mxu0 0
    %506 = vmatpush1.bf16.msra.mxu0 0
    %507 = vmatprep.subr.bf16.mxu0 0
    %508 = vmatpush1.bf16.msra.mxu0 %v491
    %509 = vmatprep.subr.bf16.mxu0 0
    %510 = vmatpush2.bf16.msra.mxu0 0
    %511 = vmatprep.subr.bf16.mxu0 0
    %512 = vmatpush2.bf16.msra.mxu0 0
    %513 = vmatprep.subr.bf16.mxu0 0
    %514 = vmatpush2.bf16.msra.mxu0 0
    %515 = vmatprep.subr.bf16.mxu0 0
    %516 = vmatpush2.bf16.msra.mxu0 0
    %517 = vmatprep.subr.bf16.mxu0 0
    %518 = vmatpush2.bf16.msra.mxu0 0
    %519 = vmatprep.subr.bf16.mxu0 0
    %520 = vmatpush2.bf16.msra.mxu0 0
    %521 = vmatprep.subr.bf16.mxu0 0
    %522 = vmatpush2.bf16.msra.mxu0 0
    %523 = vmatprep.subr.bf16.mxu0 0
    %524 = vmatpush2.bf16.msra.mxu0 0
    %525 = vmatprep.mubr.bf16.mxu0 0
    %526 = vmatmul.mubr.bf16.gmra.mxu0 %v488
    %v527 = vpop.f32.mrf.mxu0
    %v528 = vadd.f32 0.0, %v527
    %v529 = vpop.f32.mrf.mxu0
    %v530 = vpop.f32.mrf.mxu0
    %v531 = vadd.f32 0.0, %v530
    %v532 = vpop.f32.mrf.mxu0
    %533 = vdwg.mxu0
    %v535 = vsel %vm244, %v365, 0
    %v538 = vsel %vm248, %v80, 0
    %540 = vmatprep.subr.bf16.mxu0 0
    %541 = vmatpush1.bf16.msra.mxu0 0
    %542 = vmatprep.subr.bf16.mxu0 0
    %543 = vmatpush1.bf16.msra.mxu0 0
    %544 = vmatprep.subr.bf16.mxu0 0
    %545 = vmatpush1.bf16.msra.mxu0 0
    %546 = vmatprep.subr.bf16.mxu0 0
    %547 = vmatpush1.bf16.msra.mxu0 0
    %548 = vmatprep.subr.bf16.mxu0 0
    %549 = vmatpush1.bf16.msra.mxu0 0
    %550 = vmatprep.subr.bf16.mxu0 0
    %551 = vmatpush1.bf16.msra.mxu0 0
    %552 = vmatprep.subr.bf16.mxu0 0
    %553 = vmatpush1.bf16.msra.mxu0 0
    %554 = vmatprep.subr.bf16.mxu0 0
    %555 = vmatpush1.bf16.msra.mxu0 %v538
    %556 = vmatprep.subr.bf16.mxu0 0
    %557 = vmatpush2.bf16.msra.mxu0 0
    %558 = vmatprep.subr.bf16.mxu0 0
    %559 = vmatpush2.bf16.msra.mxu0 0
    %560 = vmatprep.subr.bf16.mxu0 0
    %561 = vmatpush2.bf16.msra.mxu0 0
    %562 = vmatprep.subr.bf16.mxu0 0
    %563 = vmatpush2.bf16.msra.mxu0 0
    %564 = vmatprep.subr.bf16.mxu0 0
    %565 = vmatpush2.bf16.msra.mxu0 0
    %566 = vmatprep.subr.bf16.mxu0 0
    %567 = vmatpush2.bf16.msra.mxu0 0
    %568 = vmatprep.subr.bf16.mxu0 0
    %569 = vmatpush2.bf16.msra.mxu0 0
    %570 = vmatprep.subr.bf16.mxu0 0
    %571 = vmatpush2.bf16.msra.mxu0 0
    %572 = vmatprep.mubr.bf16.mxu0 0
    %573 = vmatmul.mubr.bf16.gmra.mxu0 %v535
    %v574 = vpop.f32.mrf.mxu0
    %v575 = vadd.f32 %v528, %v574
    %v576 = vpop.f32.mrf.mxu0
    %v577 = vpop.f32.mrf.mxu0
    %v578 = vadd.f32 %v531, %v577
    %v579 = vpop.f32.mrf.mxu0
    %580 = vdwg.mxu0
    %v581 = vpack.c.bf16 %v229, %v229
    %582 = vrot.lane.b32.xlu0 %v202, 112
    %v583 = vpop.permute.xlu0 %582
    %v585 = vsel %vm244, %v583, 0
    %v588 = vsel %vm248, %v581, 0
    %590 = vmatprep.subr.bf16.mxu0 0
    %591 = vmatpush1.bf16.msra.mxu0 0
    %592 = vmatprep.subr.bf16.mxu0 0
    %593 = vmatpush1.bf16.msra.mxu0 0
    %594 = vmatprep.subr.bf16.mxu0 0
    %595 = vmatpush1.bf16.msra.mxu0 0
    %596 = vmatprep.subr.bf16.mxu0 0
    %597 = vmatpush1.bf16.msra.mxu0 0
    %598 = vmatprep.subr.bf16.mxu0 0
    %599 = vmatpush1.bf16.msra.mxu0 0
    %600 = vmatprep.subr.bf16.mxu0 0
    %601 = vmatpush1.bf16.msra.mxu0 0
    %602 = vmatprep.subr.bf16.mxu0 0
    %603 = vmatpush1.bf16.msra.mxu0 0
    %604 = vmatprep.subr.bf16.mxu0 0
    %605 = vmatpush1.bf16.msra.mxu0 %v588
    %606 = vmatprep.subr.bf16.mxu0 0
    %607 = vmatpush2.bf16.msra.mxu0 0
    %608 = vmatprep.subr.bf16.mxu0 0
    %609 = vmatpush2.bf16.msra.mxu0 0
    %610 = vmatprep.subr.bf16.mxu0 0
    %611 = vmatpush2.bf16.msra.mxu0 0
    %612 = vmatprep.subr.bf16.mxu0 0
    %613 = vmatpush2.bf16.msra.mxu0 0
    %614 = vmatprep.subr.bf16.mxu0 0
    %615 = vmatpush2.bf16.msra.mxu0 0
    %616 = vmatprep.subr.bf16.mxu0 0
    %617 = vmatpush2.bf16.msra.mxu0 0
    %618 = vmatprep.subr.bf16.mxu0 0
    %619 = vmatpush2.bf16.msra.mxu0 0
    %620 = vmatprep.subr.bf16.mxu0 0
    %621 = vmatpush2.bf16.msra.mxu0 0
    %622 = vmatprep.mubr.bf16.mxu0 0
    %623 = vmatmul.mubr.bf16.gmra.mxu0 %v585
    %v624 = vpop.f32.mrf.mxu0
    %v625 = vadd.f32 %v74, %v624
    %v626 = vpop.f32.mrf.mxu0
    %v627 = vpop.f32.mrf.mxu0
    %v628 = vadd.f32 %v75, %v627
    %v629 = vpop.f32.mrf.mxu0
    %630 = vdwg.mxu0
    %v631 = vsel %vm293, %v625, -inf
    %632 = vmax.xlane.f32.xlu0 %v631
    %v633 = vpop.xlane.xlu0 %632
    %v634 = vsel %vm293, %v628, -inf
    %635 = vmax.xlane.f32.xlu0 %v634
    %v636 = vpop.xlane.xlu0 %635
    %v637 = vsub.f32 %v625, %v633
    %v638 = vsub.f32 %v628, %v636
    %v639 = vmul.f32 %v637, 1.442695
    %v640 = vpow.pop %v639
    %v641 = vmul.f32 %v638, 1.442695
    %v642 = vpow.pop %v641
    %v643 = vsel %vm293, %v640, 0.0
    %644 = vadd.xlane.f32.xlu0 %v643
    %v645 = vpop.xlane.xlu0 %644
    %v646 = vsel %vm293, %v642, 0.0
    %647 = vadd.xlane.f32.xlu0 %v646
    %v648 = vpop.xlane.xlu0 %647
    %v649 = vrcp.pop %v645
    %v650 = vrcp.pop %v648
    %v651 = vpack.c.bf16 %v642, %v640
    %652 = vrot.lane.b32.xlu0 %v202, 48
    %v653 = vpop.permute.xlu0 %652
    %v656 = vsel %vm293, %v651, 0
    %658 = vmatprep.subr.bf16.mxu0 0
    %659 = vmatpush1.bf16.msra.mxu0 0
    %660 = vmatprep.subr.bf16.mxu0 0
    %661 = vmatpush1.bf16.msra.mxu0 0
    %662 = vmatprep.subr.bf16.mxu0 0
    %663 = vmatpush1.bf16.msra.mxu0 0
    %664 = vmatprep.subr.bf16.mxu0 0
    %665 = vmatpush1.bf16.msra.mxu0 0
    %666 = vmatprep.subr.bf16.mxu0 0
    %667 = vmatpush1.bf16.msra.mxu0 0
    %668 = vmatprep.subr.bf16.mxu0 0
    %669 = vmatpush1.bf16.msra.mxu0 0
    %670 = vmatprep.subr.bf16.mxu0 0
    %671 = vmatpush1.bf16.msra.mxu0 0
    %672 = vmatprep.subr.bf16.mxu0 0
    %673 = vmatpush1.bf16.msra.mxu0 %v653
    %674 = vmatprep.subr.bf16.mxu0 0
    %675 = vmatpush2.bf16.msra.mxu0 0
    %676 = vmatprep.subr.bf16.mxu0 0
    %677 = vmatpush2.bf16.msra.mxu0 0
    %678 = vmatprep.subr.bf16.mxu0 0
    %679 = vmatpush2.bf16.msra.mxu0 0
    %680 = vmatprep.subr.bf16.mxu0 0
    %681 = vmatpush2.bf16.msra.mxu0 0
    %682 = vmatprep.subr.bf16.mxu0 0
    %683 = vmatpush2.bf16.msra.mxu0 0
    %684 = vmatprep.subr.bf16.mxu0 0
    %685 = vmatpush2.bf16.msra.mxu0 0
    %686 = vmatprep.subr.bf16.mxu0 0
    %687 = vmatpush2.bf16.msra.mxu0 0
    %688 = vmatprep.subr.bf16.mxu0 0
    %689 = vmatpush2.bf16.msra.mxu0 0
    %690 = vmatprep.mubr.bf16.mxu0 0
    %691 = vmatmul.mubr.bf16.gmra.mxu0 %v656
    %v692 = vpop.f32.mrf.mxu0
    %v693 = vadd.f32 0.0, %v692
    %v694 = vpop.f32.mrf.mxu0
    %v695 = vpop.f32.mrf.mxu0
    %v696 = vadd.f32 0.0, %v695
    %v697 = vpop.f32.mrf.mxu0
    %698 = vdwg.mxu0
    %v699 = vmul.f32 %v693, %v649
    %v700 = vmul.f32 %v696, %v650
    %v701 = vpack.c.bf16 %v700, %v699
    %v703 = vsel %vm244, %v701, 0
    %v706 = vsel %vm248, %v82, 0
    %708 = vmatprep.subr.bf16.mxu0 0
    %709 = vmatpush1.bf16.msra.mxu0 0
    %710 = vmatprep.subr.bf16.mxu0 0
    %711 = vmatpush1.bf16.msra.mxu0 0
    %712 = vmatprep.subr.bf16.mxu0 0
    %713 = vmatpush1.bf16.msra.mxu0 0
    %714 = vmatprep.subr.bf16.mxu0 0
    %715 = vmatpush1.bf16.msra.mxu0 0
    %716 = vmatprep.subr.bf16.mxu0 0
    %717 = vmatpush1.bf16.msra.mxu0 0
    %718 = vmatprep.subr.bf16.mxu0 0
    %719 = vmatpush1.bf16.msra.mxu0 0
    %720 = vmatprep.subr.bf16.mxu0 0
    %721 = vmatpush1.bf16.msra.mxu0 0
    %722 = vmatprep.subr.bf16.mxu0 0
    %723 = vmatpush1.bf16.msra.mxu0 %v706
    %724 = vmatprep.subr.bf16.mxu0 0
    %725 = vmatpush2.bf16.msra.mxu0 0
    %726 = vmatprep.subr.bf16.mxu0 0
    %727 = vmatpush2.bf16.msra.mxu0 0
    %728 = vmatprep.subr.bf16.mxu0 0
    %729 = vmatpush2.bf16.msra.mxu0 0
    %730 = vmatprep.subr.bf16.mxu0 0
    %731 = vmatpush2.bf16.msra.mxu0 0
    %732 = vmatprep.subr.bf16.mxu0 0
    %733 = vmatpush2.bf16.msra.mxu0 0
    %734 = vmatprep.subr.bf16.mxu0 0
    %735 = vmatpush2.bf16.msra.mxu0 0
    %736 = vmatprep.subr.bf16.mxu0 0
    %737 = vmatpush2.bf16.msra.mxu0 0
    %738 = vmatprep.subr.bf16.mxu0 0
    %739 = vmatpush2.bf16.msra.mxu0 0
    %740 = vmatprep.mubr.bf16.mxu0 0
    %741 = vmatmul.mubr.bf16.gmra.mxu0 %v703
    %v742 = vpop.f32.mrf.mxu0
    %v743 = vadd.f32 0.0, %v742
    %v744 = vpop.f32.mrf.mxu0
    %v745 = vpop.f32.mrf.mxu0
    %v746 = vadd.f32 0.0, %v745
    %v747 = vpop.f32.mrf.mxu0
    %748 = vdwg.mxu0
    %v749 = vadd.f32 %v575, %v743
    %v750 = vadd.f32 %v578, %v746
    %v751 = vpack.c.bf16 %v230, %v230
    %752 = vrot.lane.b32.xlu0 %v202, 104
    %v753 = vpop.permute.xlu0 %752
    %v755 = vsel %vm244, %v753, 0
    %v758 = vsel %vm248, %v751, 0
    %760 = vmatprep.subr.bf16.mxu0 0
    %761 = vmatpush1.bf16.msra.mxu0 0
    %762 = vmatprep.subr.bf16.mxu0 0
    %763 = vmatpush1.bf16.msra.mxu0 0
    %764 = vmatprep.subr.bf16.mxu0 0
    %765 = vmatpush1.bf16.msra.mxu0 0
    %766 = vmatprep.subr.bf16.mxu0 0
    %767 = vmatpush1.bf16.msra.mxu0 0
    %768 = vmatprep.subr.bf16.mxu0 0
    %769 = vmatpush1.bf16.msra.mxu0 0
    %770 = vmatprep.subr.bf16.mxu0 0
    %771 = vmatpush1.bf16.msra.mxu0 0
    %772 = vmatprep.subr.bf16.mxu0 0
    %773 = vmatpush1.bf16.msra.mxu0 0
    %774 = vmatprep.subr.bf16.mxu0 0
    %775 = vmatpush1.bf16.msra.mxu0 %v758
    %776 = vmatprep.subr.bf16.mxu0 0
    %777 = vmatpush2.bf16.msra.mxu0 0
    %778 = vmatprep.subr.bf16.mxu0 0
    %779 = vmatpush2.bf16.msra.mxu0 0
    %780 = vmatprep.subr.bf16.mxu0 0
    %781 = vmatpush2.bf16.msra.mxu0 0
    %782 = vmatprep.subr.bf16.mxu0 0
    %783 = vmatpush2.bf16.msra.mxu0 0
    %784 = vmatprep.subr.bf16.mxu0 0
    %785 = vmatpush2.bf16.msra.mxu0 0
    %786 = vmatprep.subr.bf16.mxu0 0
    %787 = vmatpush2.bf16.msra.mxu0 0
    %788 = vmatprep.subr.bf16.mxu0 0
    %789 = vmatpush2.bf16.msra.mxu0 0
    %790 = vmatprep.subr.bf16.mxu0 0
    %791 = vmatpush2.bf16.msra.mxu0 0
    %792 = vmatprep.mubr.bf16.mxu0 0
    %793 = vmatmul.mubr.bf16.gmra.mxu0 %v755
    %v794 = vpop.f32.mrf.mxu0
    %v795 = vadd.f32 %v74, %v794
    %v796 = vpop.f32.mrf.mxu0
    %v797 = vpop.f32.mrf.mxu0
    %v798 = vadd.f32 %v75, %v797
    %v799 = vpop.f32.mrf.mxu0
    %800 = vdwg.mxu0
    %v801 = vsel %vm293, %v795, -inf
    %802 = vmax.xlane.f32.xlu0 %v801
    %v803 = vpop.xlane.xlu0 %802
    %v804 = vsel %vm293, %v798, -inf
    %805 = vmax.xlane.f32.xlu0 %v804
    %v806 = vpop.xlane.xlu0 %805
    %v807 = vsub.f32 %v795, %v803
    %v808 = vsub.f32 %v798, %v806
    %v809 = vmul.f32 %v807, 1.442695
    %v810 = vpow.pop %v809
    %v811 = vmul.f32 %v808, 1.442695
    %v812 = vpow.pop %v811
    %v813 = vsel %vm293, %v810, 0.0
    %814 = vadd.xlane.f32.xlu0 %v813
    %v815 = vpop.xlane.xlu0 %814
    %v816 = vsel %vm293, %v812, 0.0
    %817 = vadd.xlane.f32.xlu0 %v816
    %v818 = vpop.xlane.xlu0 %817
    %v819 = vrcp.pop %v815
    %v820 = vrcp.pop %v818
    %v821 = vpack.c.bf16 %v812, %v810
    %822 = vrot.lane.b32.xlu0 %v202, 40
    %v823 = vpop.permute.xlu0 %822
    %v826 = vsel %vm293, %v821, 0
    %828 = vmatprep.subr.bf16.mxu0 0
    %829 = vmatpush1.bf16.msra.mxu0 0
    %830 = vmatprep.subr.bf16.mxu0 0
    %831 = vmatpush1.bf16.msra.mxu0 0
    %832 = vmatprep.subr.bf16.mxu0 0
    %833 = vmatpush1.bf16.msra.mxu0 0
    %834 = vmatprep.subr.bf16.mxu0 0
    %835 = vmatpush1.bf16.msra.mxu0 0
    %836 = vmatprep.subr.bf16.mxu0 0
    %837 = vmatpush1.bf16.msra.mxu0 0
    %838 = vmatprep.subr.bf16.mxu0 0
    %839 = vmatpush1.bf16.msra.mxu0 0
    %840 = vmatprep.subr.bf16.mxu0 0
    %841 = vmatpush1.bf16.msra.mxu0 0
    %842 = vmatprep.subr.bf16.mxu0 0
    %843 = vmatpush1.bf16.msra.mxu0 %v823
    %844 = vmatprep.subr.bf16.mxu0 0
    %845 = vmatpush2.bf16.msra.mxu0 0
    %846 = vmatprep.subr.bf16.mxu0 0
    %847 = vmatpush2.bf16.msra.mxu0 0
    %848 = vmatprep.subr.bf16.mxu0 0
    %849 = vmatpush2.bf16.msra.mxu0 0
    %850 = vmatprep.subr.bf16.mxu0 0
    %851 = vmatpush2.bf16.msra.mxu0 0
    %852 = vmatprep.subr.bf16.mxu0 0
    %853 = vmatpush2.bf16.msra.mxu0 0
    %854 = vmatprep.subr.bf16.mxu0 0
    %855 = vmatpush2.bf16.msra.mxu0 0
    %856 = vmatprep.subr.bf16.mxu0 0
    %857 = vmatpush2.bf16.msra.mxu0 0
    %858 = vmatprep.subr.bf16.mxu0 0
    %859 = vmatpush2.bf16.msra.mxu0 0
    %860 = vmatprep.mubr.bf16.mxu0 0
    %861 = vmatmul.mubr.bf16.gmra.mxu0 %v826
    %v862 = vpop.f32.mrf.mxu0
    %v863 = vadd.f32 0.0, %v862
    %v864 = vpop.f32.mrf.mxu0
    %v865 = vpop.f32.mrf.mxu0
    %v866 = vadd.f32 0.0, %v865
    %v867 = vpop.f32.mrf.mxu0
    %868 = vdwg.mxu0
    %v869 = vmul.f32 %v863, %v819
    %v870 = vmul.f32 %v866, %v820
    %v871 = vpack.c.bf16 %v870, %v869
    %v873 = vsel %vm244, %v871, 0
    %v876 = vsel %vm248, %v83, 0
    %878 = vmatprep.subr.bf16.mxu0 0
    %879 = vmatpush1.bf16.msra.mxu0 0
    %880 = vmatprep.subr.bf16.mxu0 0
    %881 = vmatpush1.bf16.msra.mxu0 0
    %882 = vmatprep.subr.bf16.mxu0 0
    %883 = vmatpush1.bf16.msra.mxu0 0
    %884 = vmatprep.subr.bf16.mxu0 0
    %885 = vmatpush1.bf16.msra.mxu0 0
    %886 = vmatprep.subr.bf16.mxu0 0
    %887 = vmatpush1.bf16.msra.mxu0 0
    %888 = vmatprep.subr.bf16.mxu0 0
    %889 = vmatpush1.bf16.msra.mxu0 0
    %890 = vmatprep.subr.bf16.mxu0 0
    %891 = vmatpush1.bf16.msra.mxu0 0
    %892 = vmatprep.subr.bf16.mxu0 0
    %893 = vmatpush1.bf16.msra.mxu0 %v876
    %894 = vmatprep.subr.bf16.mxu0 0
    %895 = vmatpush2.bf16.msra.mxu0 0
    %896 = vmatprep.subr.bf16.mxu0 0
    %897 = vmatpush2.bf16.msra.mxu0 0
    %898 = vmatprep.subr.bf16.mxu0 0
    %899 = vmatpush2.bf16.msra.mxu0 0
    %900 = vmatprep.subr.bf16.mxu0 0
    %901 = vmatpush2.bf16.msra.mxu0 0
    %902 = vmatprep.subr.bf16.mxu0 0
    %903 = vmatpush2.bf16.msra.mxu0 0
    %904 = vmatprep.subr.bf16.mxu0 0
    %905 = vmatpush2.bf16.msra.mxu0 0
    %906 = vmatprep.subr.bf16.mxu0 0
    %907 = vmatpush2.bf16.msra.mxu0 0
    %908 = vmatprep.subr.bf16.mxu0 0
    %909 = vmatpush2.bf16.msra.mxu0 0
    %910 = vmatprep.mubr.bf16.mxu0 0
    %911 = vmatmul.mubr.bf16.gmra.mxu0 %v873
    %v912 = vpop.f32.mrf.mxu0
    %v913 = vadd.f32 0.0, %v912
    %v914 = vpop.f32.mrf.mxu0
    %v915 = vpop.f32.mrf.mxu0
    %v916 = vadd.f32 0.0, %v915
    %v917 = vpop.f32.mrf.mxu0
    %918 = vdwg.mxu0
    %v919 = vadd.f32 %v749, %v913
    %v920 = vadd.f32 %v750, %v916
    %v921 = vlaneseq
    %v922 = vshrl.u32 %v921, 7
    %v923 = vsub.s32 3, %v922
    %v924 = vrot.slane %v96, %v923
    %v925 = vadd.f32 %v919, %v924
    %v926 = vadd.f32 %v920, %v924
    %v927 = vadd.f32 %v925, %v72
    %v928 = vadd.f32 %v926, %v73
    %v929 = vsel %vm97, %v927, 0.0
    %930 = vadd.xlane.f32.xlu0 %v929
    %v931 = vpop.xlane.xlu0 %930
    %v932 = vsel %vm97, %v928, 0.0
    %933 = vadd.xlane.f32.xlu0 %v932
    %v934 = vpop.xlane.xlu0 %933
    %v935 = vmul.f32 %v931, %v104
    %v936 = vmul.f32 %v934, %v104
    %v937 = vmul.f32 %v927, %v927
    %v938 = vmul.f32 %v928, %v928
    %v939 = vsel %vm97, %v937, 0.0
    %940 = vadd.xlane.f32.xlu0 %v939
    %v941 = vpop.xlane.xlu0 %940
    %v942 = vsel %vm97, %v938, 0.0
    %943 = vadd.xlane.f32.xlu0 %v942
    %v944 = vpop.xlane.xlu0 %943
    %v945 = vmul.f32 %v941, %v104
    %v946 = vmul.f32 %v944, %v104
    %v947 = vmul.f32 %v935, %v935
    %v948 = vmul.f32 %v936, %v936
    %v949 = vsub.f32 %v945, %v947
    %v950 = vsub.f32 %v946, %v948
    %v951 = vsub.f32 %v927, %v935
    %v952 = vsub.f32 %v928, %v936
    %v953 = vadd.f32 %v949, 1e-06
    %v954 = vadd.f32 %v950, 1e-06
    %v955 = vrsqrt.pop %v953
    %v956 = vrsqrt.pop %v954
    %v957 = vmul.f32 %v951, %v955
    %v958 = vmul.f32 %v952, %v956
    %v959 = vlaneseq
    %v960 = vshrl.u32 %v959, 7
    %v961 = vsub.s32 4, %v960
    %v962 = vrot.slane %v96, %v961
    %v963 = vmul.f32 %v957, %v962
    %v964 = vmul.f32 %v958, %v962
    %v965 = vlaneseq
    %v966 = vshrl.u32 %v965, 7
    %v967 = vsub.s32 5, %v966
    %v968 = vrot.slane %v96, %v967
    %v969 = vadd.f32 %v963, %v968
    %v970 = vadd.f32 %v964, %v968
    %v971 = vpack.c.bf16 %v970, %v969
    %v972 = vlaneseq
    %v973 = vshrl.u32 %v972, 7
    %v974 = vsub.s32 6, %v973
    %v975 = vrot.slane %v96, %v974
    %v980 = vunpack.c.l.b16 %v84
    %v981 = vunpack.c.l.b16 %v85
    %v982 = vunpack.c.l.b16 %v86
    %v983 = vunpack.c.l.b16 %v87
    %v984 = vpack.c.b16 %v981, %v980
    %v985 = vpack.c.b16 %v983, %v982
    %v989 = vsel %vm97, %v971, 0
    %991 = vmatprep.subr.bf16.mxu0 0
    %992 = vmatpush1.bf16.msra.mxu0 0
    %993 = vmatprep.subr.bf16.mxu0 0
    %994 = vmatpush1.bf16.msra.mxu0 0
    %995 = vmatprep.subr.bf16.mxu0 0
    %996 = vmatpush1.bf16.msra.mxu0 0
    %997 = vmatprep.subr.bf16.mxu0 0
    %998 = vmatpush1.bf16.msra.mxu0 0
    %999 = vmatprep.subr.bf16.mxu0 0
    %1000 = vmatpush1.bf16.msra.mxu0 0
    %1001 = vmatprep.subr.bf16.mxu0 0
    %1002 = vmatpush1.bf16.msra.mxu0 0
    %1003 = vmatprep.subr.bf16.mxu0 0
    %1004 = vmatpush1.bf16.msra.mxu0 %v985
    %1005 = vmatprep.subr.bf16.mxu0 0
    %1006 = vmatpush1.bf16.msra.mxu0 %v984
    %1007 = vmatprep.subr.bf16.mxu0 0
    %1008 = vmatpush2.bf16.msra.mxu0 0
    %1009 = vmatprep.subr.bf16.mxu0 0
    %1010 = vmatpush2.bf16.msra.mxu0 0
    %1011 = vmatprep.subr.bf16.mxu0 0
    %1012 = vmatpush2.bf16.msra.mxu0 0
    %1013 = vmatprep.subr.bf16.mxu0 0
    %1014 = vmatpush2.bf16.msra.mxu0 0
    %1015 = vmatprep.subr.bf16.mxu0 0
    %1016 = vmatpush2.bf16.msra.mxu0 0
    %1017 = vmatprep.subr.bf16.mxu0 0
    %1018 = vmatpush2.bf16.msra.mxu0 0
    %1019 = vmatprep.subr.bf16.mxu0 0
    %1020 = vmatpush2.bf16.msra.mxu0 0
    %1021 = vmatprep.subr.bf16.mxu0 0
    %1022 = vmatpush2.bf16.msra.mxu0 0
    %1023 = vmatprep.mubr.bf16.mxu0 0
    %1024 = vmatmul.mubr.bf16.gmra.mxu0 %v989
    %v1025 = vpop.f32.mrf.mxu0
    %v1026 = vadd.f32 %v975, %v1025
    %v1027 = vpop.f32.mrf.mxu0
    %v1028 = vpop.f32.mrf.mxu0
    %v1029 = vadd.f32 %v975, %v1028
    %v1030 = vpop.f32.mrf.mxu0
    %1031 = vdwg.mxu0
    %v1032 = vmax.f32 %v1026, 0.0
    %v1033 = vmax.f32 %v1029, 0.0
    %v1034 = vpack.c.bf16 %v1033, %v1032
    %v1035 = vlaneseq
    %v1036 = vshrl.u32 %v1035, 7
    %v1037 = vsub.s32 7, %v1036
    %v1038 = vrot.slane %v96, %v1037
    %v1047 = vunpack.c.l.b16 %v88
    %v1048 = vunpack.c.l.b16 %v89
    %v1049 = vunpack.c.l.b16 %v90
    %v1050 = vunpack.c.l.b16 %v91
    %v1051 = vunpack.c.l.b16 %v92
    %v1052 = vunpack.c.l.b16 %v93
    %v1053 = vunpack.c.l.b16 %v94
    %v1054 = vunpack.c.l.b16 %v95
    %v1055 = vpack.c.b16 %v1048, %v1047
    %v1056 = vpack.c.b16 %v1050, %v1049
    %v1057 = vpack.c.b16 %v1052, %v1051
    %v1058 = vpack.c.b16 %v1054, %v1053
    %vm1063 = vcmask 523264
    %v1065 = vsel %vm1063, %v1034, 0
    %1067 = vmatprep.subr.bf16.mxu0 0
    %1068 = vmatpush1.bf16.msra.mxu0 0
    %1069 = vmatprep.subr.bf16.mxu0 0
    %1070 = vmatpush1.bf16.msra.mxu0 0
    %1071 = vmatprep.subr.bf16.mxu0 0
    %1072 = vmatpush1.bf16.msra.mxu0 0
    %1073 = vmatprep.subr.bf16.mxu0 0
    %1074 = vmatpush1.bf16.msra.mxu0 0
    %1075 = vmatprep.subr.bf16.mxu0 0
    %1076 = vmatpush1.bf16.msra.mxu0 %v1058
    %1077 = vmatprep.subr.bf16.mxu0 0
    %1078 = vmatpush1.bf16.msra.mxu0 %v1057
    %1079 = vmatprep.subr.bf16.mxu0 0
    %1080 = vmatpush1.bf16.msra.mxu0 %v1056
    %1081 = vmatprep.subr.bf16.mxu0 0
    %1082 = vmatpush1.bf16.msra.mxu0 %v1055
    %1083 = vmatprep.subr.bf16.mxu0 0
    %1084 = vmatpush2.bf16.msra.mxu0 0
    %1085 = vmatprep.subr.bf16.mxu0 0
    %1086 = vmatpush2.bf16.msra.mxu0 0
    %1087 = vmatprep.subr.bf16.mxu0 0
    %1088 = vmatpush2.bf16.msra.mxu0 0
    %1089 = vmatprep.subr.bf16.mxu0 0
    %1090 = vmatpush2.bf16.msra.mxu0 0
    %1091 = vmatprep.subr.bf16.mxu0 0
    %1092 = vmatpush2.bf16.msra.mxu0 0
    %1093 = vmatprep.subr.bf16.mxu0 0
    %1094 = vmatpush2.bf16.msra.mxu0 0
    %1095 = vmatprep.subr.bf16.mxu0 0
    %1096 = vmatpush2.bf16.msra.mxu0 0
    %1097 = vmatprep.subr.bf16.mxu0 0
    %1098 = vmatpush2.bf16.msra.mxu0 0
    %1099 = vmatprep.mubr.bf16.mxu0 0
    %1100 = vmatmul.mubr.bf16.gmra.mxu0 %v1065
    %v1101 = vpop.f32.mrf.mxu0
    %v1102 = vadd.f32 %v1038, %v1101
    %v1103 = vpop.f32.mrf.mxu0
    %v1104 = vpop.f32.mrf.mxu0
    %v1105 = vadd.f32 %v1038, %v1104
    %v1106 = vpop.f32.mrf.mxu0
    %1107 = vdwg.mxu0
    %v1108 = vadd.f32 %v1102, %v927
    %v1109 = vadd.f32 %v1105, %v928
    %1110 = vst.msk [vmem:[#allocation10] sm:$0xff] %vm97, %v1108
    %1111 = vst.msk [vmem:[#allocation10 + $0x8] sm:$0xff] %vm97, %v1109
    // Predicated region
    $region34: #{transformer_encoder_layer.1} parent=1 // pred_check
      _
    $region35: #{transformer_encoder_layer.1} parent=1 // pred_check_branch
      %1113 = sbr.rel (0) target = $region37
    $region36: #{transformer_encoder_layer.1} parent=1 // pred_region
      %s1115 = ssub.s32 256, 256
      %1116 = vsyncadd [#allocation4], %s1115
      %s1117 = sshll.u32 [#allocation10], 4
      %s1118 = int_to_ptr.vmem [resolvable:$true] %s1117
      %1123 = dma.vmem_to_hbm [thread:$0]  %s1118, 256, %s4, [#allocation4], 128, 128, 8
    $region37: #{transformer_encoder_layer.1} parent=1 // pred_fallthru
      _
    // Predicated region
    $region38: #{transformer_encoder_layer.1} parent=1 // pred_check
      _
    $region39: #{transformer_encoder_layer.1} parent=1 // pred_check_branch
      %1125 = sbr.rel (0) target = $region41
    $region40: #{transformer_encoder_layer.1} parent=1 // pred_region
      %1126 = dma.done [#allocation4], 256
    $region41: #{transformer_encoder_layer.1} parent=1 // pred_fallthru
      _
    %1127 = vsyncpa [#allocation3], 1
    %1128 = vsyncpa [#allocation6], 1
    %1129 = vsyncpa [#allocation9], 1
    %1130 = vsyncpa [#allocation4], 1

</llo_original>
